<compile_context>
chip_gen: v7x
topology: tpu7x:2x2x1
jax: 0.10.0
libtpu: 0.0.40
codegen_flags: <defaults>
</compile_context>

<pallas_src>
import functools

import numpy as np
import jax
import jax.numpy as jnp
from jax import lax
from jax.experimental import pallas as pl
from jax.experimental.pallas import tpu as pltpu

NEG_SLOPE = 0.01  # torch.nn.LeakyReLU default
BN_EPS = 1e-5     # torch.nn.BatchNorm2d default


def _leaky_relu(x):
    return jnp.where(x > 0, x, NEG_SLOPE * x)


def _res_unit_kernel(x_ref, halo_ref, w1_ref, b1_ref, w2_ref, b2_ref, o_ref,
                     u_ref):
    """One (batch, row-tile) grid step.

    x_ref   : (1, TH, W, C)        input row tile (NHWC), f32
    halo_ref: (1, 2, W, C)         row above / row below the tile, f32
    w1_ref  : (C, Cr)              1x1 conv weight (BN folded), bf16
    b1_ref  : (1, Cr)              1x1 conv bias   (BN folded), f32
    w2_ref  : (3, 3*Cr, C)         3x3 conv weight (BN folded), bf16,
                                   w2[dy, dx*Cr + c, co]
    b2_ref  : (1, C)               3x3 conv bias   (BN folded), f32
    o_ref   : (1, TH, W, C)        output tile
    u_ref   : (TH+2, W, 3*Cr) bf16 dx-concatenated staging buffer (scratch)
    """
    _, TH, W, C = x_ref.shape
    Cr = w1_ref.shape[1]
    THp = TH + 2
    h = pl.program_id(1)
    nh = pl.num_programs(1)

    # ---- layer1 (1x1 conv + folded BN + LeakyReLU) over main + halo rows ----
    x_main = x_ref[0]                                          # (TH, W, C) f32
    x_all = jnp.concatenate(
        [halo_ref[0, 0:1], x_main, halo_ref[0, 1:2]], axis=0)  # (TH+2, W, C)
    xm = x_all.reshape(THp * W, C).astype(jnp.bfloat16)
    h1 = _leaky_relu(
        jnp.dot(xm, w1_ref[...], preferred_element_type=jnp.float32)
        + b1_ref[...])
    h1 = h1.reshape(THp, W, Cr)

    # Rows outside the image must give *zero* layer-1 output (the 3x3 conv's
    # zero padding applies to layer1's output, not leaky(b1) of a zero input).
    row = lax.broadcasted_iota(jnp.int32, (THp, 1, 1), 0)
    keep = jnp.logical_and(jnp.logical_or(row != 0, h > 0),
                           jnp.logical_or(row != THp - 1, h < nh - 1))
    h1b = jnp.where(keep, h1, 0.0).astype(jnp.bfloat16)

    # ---- dx-concatenated staging buffer ----
    #   u[r, x, dx*Cr + c] = h1[r, x + dx - 1, c]   (zero outside [0, W))
    zcol = jnp.zeros((THp, 1, Cr), jnp.bfloat16)
    u_ref[:, :, Cr:2 * Cr] = h1b                               # dx = 1 (center)
    u_ref[:, 1:W, 0:Cr] = h1b[:, 0:W - 1]                      # dx = 0 (left)
    u_ref[:, 0:1, 0:Cr] = zcol
    u_ref[:, 0:W - 1, 2 * Cr:3 * Cr] = h1b[:, 1:W]             # dx = 2 (right)
    u_ref[:, W - 1:W, 2 * Cr:3 * Cr] = zcol

    # ---- layer2: 3x3 conv as 3 fat matmuls (K = 3*Cr), bias-initialized ----
    acc = jnp.broadcast_to(b2_ref[...], (TH * W, C))           # f32
    for dy in range(3):
        tap = u_ref[dy:dy + TH].reshape(TH * W, 3 * Cr)        # bf16
        acc = acc + jnp.dot(tap, w2_ref[dy],
                            preferred_element_type=jnp.float32)

    # ---- LeakyReLU + residual add (all f32) ----
    out = _leaky_relu(acc) + x_main.reshape(TH * W, C)
    o_ref[0] = out.reshape(TH, W, C).astype(o_ref.dtype)


def _pick_tile_h(H, W, C, Cr, budget_bytes=12 * 1024 * 1024):
    """Largest divisor of H whose per-step working set fits the budget
    (x / halo / out blocks double-buffered in f32, plus the bf16 staging
    scratch). Conservative for v7x's 64 MiB VMEM / 32 MiB scoped limit."""
    for th in range(H, 0, -1):
        if H % th:
            continue
        blocks = 2 * (2 * th * W * C * 4 + 2 * W * C * 4)   # x + out + halo, x2 buf
        scratch = (th + 2) * W * 3 * Cr * 2                 # u staging, bf16
        if blocks + scratch <= budget_bytes:
            return th
    return 1


@functools.partial(jax.jit, static_argnames=("tile_h",))
def res_unit_pallas(x_nchw, w1, b1, w2, b2, tile_h=None):
    """x_nchw: (N, C, H, W) float32. Returns (N, C, H, W)."""
    # TODO(synk): in a full Darknet53 model keep activations NHWC end-to-end
    # (or fold the layout change into the BlockSpec) to avoid these two extra
    # HBM transpose passes; the NCHW boundary is kept here to match PyTorch.
    x = jnp.transpose(x_nchw, (0, 2, 3, 1))            # NCHW -> NHWC
    N, H, W, C = x.shape
    Cr = w1.shape[1]

    TH = tile_h if tile_h is not None else _pick_tile_h(H, W, C, Cr)
    if H % TH:
        raise ValueError(f"tile_h={TH} must divide H={H}")
    n_h = H // TH

    # Halo rows for each tile: the row just above and just below the tile
    # (clamped at the image border; the kernel zeroes out-of-image h1 rows).
    hidx = np.arange(n_h)
    top = x[:, np.maximum(hidx * TH - 1, 0)]           # (N, n_h, W, C)
    bot = x[:, np.minimum(hidx * TH + TH, H - 1)]      # (N, n_h, W, C)
    halo = jnp.stack([top, bot], axis=2).reshape(N, 2 * n_h, W, C)

    out = pl.pallas_call(
        _res_unit_kernel,
        out_shape=jax.ShapeDtypeStruct((N, H, W, C), x.dtype),
        grid_spec=pltpu.PrefetchScalarGridSpec(
            num_scalar_prefetch=0,
            grid=(N, n_h),
            in_specs=[
                pl.BlockSpec((1, TH, W, C), lambda n, h: (n, h, 0, 0)),
                pl.BlockSpec((1, 2, W, C), lambda n, h: (n, h, 0, 0)),
                pl.BlockSpec((C, Cr), lambda n, h: (0, 0)),
                pl.BlockSpec((1, Cr), lambda n, h: (0, 0)),
                pl.BlockSpec((3, 3 * Cr, C), lambda n, h: (0, 0, 0)),
                pl.BlockSpec((1, C), lambda n, h: (0, 0)),
            ],
            out_specs=pl.BlockSpec((1, TH, W, C), lambda n, h: (n, h, 0, 0)),
            scratch_shapes=[
                pltpu.VMEM((TH + 2, W, 3 * Cr), jnp.bfloat16),
            ],
        ),
        compiler_params=pltpu.CompilerParams(
            dimension_semantics=("parallel", "parallel"),
            vmem_limit_bytes=32 * 1024 * 1024,
        ),
    )(x, halo, w1, b1, w2, b2)

    return jnp.transpose(out, (0, 3, 1, 2))            # NHWC -> NCHW


# -------------------------- parameter construction --------------------------

def _fold_bn(w_hwio, b, gamma, beta, mean, var):
    """Fold inference-mode BatchNorm into conv weight (HWIO) / bias."""
    scale = gamma / jnp.sqrt(var + BN_EPS)             # (Cout,)
    w_f = w_hwio * scale[None, None, None, :]
    b_f = (b - mean) * scale + beta
    return w_f, b_f


def make_params(key, in_c):
    reduce_c = in_c // 2
    ks = jax.random.split(key, 10)
    # conv weights in HWIO layout
    w1 = jax.random.normal(ks[0], (1, 1, in_c, reduce_c), jnp.float32) * 0.1
    b1 = jax.random.normal(ks[1], (reduce_c,), jnp.float32) * 0.1
    w2 = jax.random.normal(ks[2], (3, 3, reduce_c, in_c), jnp.float32) * 0.1
    b2 = jax.random.normal(ks[3], (in_c,), jnp.float32) * 0.1
    # BatchNorm (eval mode, running stats)
    g1 = 1.0 + 0.1 * jax.random.normal(ks[4], (reduce_c,), jnp.float32)
    be1 = 0.1 * jax.random.normal(ks[5], (reduce_c,), jnp.float32)
    m1 = 0.1 * jax.random.normal(ks[6], (reduce_c,), jnp.float32)
    v1 = jnp.abs(1.0 + 0.1 * jax.random.normal(ks[7], (reduce_c,), jnp.float32))
    g2 = 1.0 + 0.1 * jax.random.normal(ks[8], (in_c,), jnp.float32)
    be2 = 0.1 * jax.random.normal(ks[9], (in_c,), jnp.float32)
    m2 = jnp.zeros((in_c,), jnp.float32)
    v2 = jnp.ones((in_c,), jnp.float32)

    w1f, b1f = _fold_bn(w1, b1, g1, be1, m1, v1)
    w2f, b2f = _fold_bn(w2, b2, g2, be2, m2, v2)

    # Kernel-friendly layouts (bf16 MXU operands, f32 biases).
    w1k = w1f[0, 0].astype(jnp.bfloat16)                       # (C, Cr)
    b1k = b1f[None, :].astype(jnp.float32)                     # (1, Cr)
    w2k = w2f.reshape(3, 3 * reduce_c, in_c).astype(jnp.bfloat16)  # (3, 3Cr, C)
    b2k = b2f[None, :].astype(jnp.float32)                     # (1, C)
    return w1k, b1k, w2k, b2k


# ------------------------------ pure-JAX reference ---------------------------

def res_unit_ref(x_nchw, w1, b1, w2, b2):
    C = x_nchw.shape[1]
    Cr = w1.shape[1]
    w1f = w1.astype(jnp.float32)
    w2f = w2.astype(jnp.float32).reshape(3, 3, Cr, C)
    x = jnp.transpose(x_nchw, (0, 2, 3, 1))                    # NHWC
    h = lax.conv_general_dilated(
        x, w1f[None, None, :, :], (1, 1), 'VALID',
        dimension_numbers=('NHWC', 'HWIO', 'NHWC'),
        precision=lax.Precision.HIGHEST) + b1[0]
    h = _leaky_relu(h)
    o = lax.conv_general_dilated(
        h, w2f, (1, 1), ((1, 1), (1, 1)),
        dimension_numbers=('NHWC', 'HWIO', 'NHWC'),
        precision=lax.Precision.HIGHEST) + b2[0]
    o = _leaky_relu(o) + x
    return jnp.transpose(o, (0, 3, 1, 2))


if __name__ == "__main__":
    key = jax.random.PRNGKey(0)
    kx, kp = jax.random.split(key)

    N, C, H, W = 2, 8, 16, 16                                  # in_c=8 -> reduce_c=4
    x = jax.random.normal(kx, (N, C, H, W), jnp.float32)
    w1, b1, w2, b2 = make_params(kp, C)

    # tile_h=8 -> grid=(2, 2), exercises the row-tiling + halo path.
    out = res_unit_pallas(x, w1, b1, w2, b2, tile_h=8)
    out = jax.block_until_ready(out)

    ref = jax.block_until_ready(res_unit_ref(x, w1, b1, w2, b2))
    assert out.shape == (N, C, H, W)
    err = float(jnp.max(jnp.abs(out - ref)))
    # bf16 matmul operands (f32 accumulate) -> loosened tolerance.
    assert err < 5e-2, f"mismatch vs reference: {err}"

    print("KERNEL_OK")
</pallas_src>

<mosaic_0001>
module attributes {stable_mosaic.version = 11 : i64} {
  func.func @_res_unit_kernel(%arg0: i32, %arg1: i32, %arg2: memref<1x8x16x8xf32, #tpu.memory_space<vmem>>, %arg3: memref<1x2x16x8xf32, #tpu.memory_space<vmem>>, %arg4: memref<8x4xbf16, #tpu.memory_space<vmem>>, %arg5: memref<1x4xf32, #tpu.memory_space<vmem>>, %arg6: memref<3x12x8xbf16, #tpu.memory_space<vmem>>, %arg7: memref<1x8xf32, #tpu.memory_space<vmem>>, %arg8: memref<1x8x16x8xf32, #tpu.memory_space<vmem>>, %arg9: memref<10x16x12xbf16, #tpu.memory_space<vmem>>) attributes {dimension_semantics = [#tpu.dimension_semantics<parallel>, #tpu.dimension_semantics<parallel>], iteration_bounds = array<i64: 2, 2>, scalar_prefetch = 0 : i64, scratch_operands = 1 : i64, tpu.core_type = #tpu.core_type<tc>, window_params = [{transform_indices = @transform_0, window_bounds = array<i64: 1, 8, 16, 8>}, {transform_indices = @transform_1, window_bounds = array<i64: 1, 2, 16, 8>}, {pipeline_mode = #tpu.pipeline_mode<synchronous>, transform_indices = @transform_2, window_bounds = array<i64: 8, 4>}, {pipeline_mode = #tpu.pipeline_mode<synchronous>, transform_indices = @transform_3, window_bounds = array<i64: 1, 4>}, {pipeline_mode = #tpu.pipeline_mode<synchronous>, transform_indices = @transform_4, window_bounds = array<i64: 3, 12, 8>}, {pipeline_mode = #tpu.pipeline_mode<synchronous>, transform_indices = @transform_5, window_bounds = array<i64: 1, 8>}, {transform_indices = @transform_6, window_bounds = array<i64: 1, 8, 16, 8>}]} {
    %c0 = arith.constant 0 : index
    %c0_0 = arith.constant 0 : index
    %c0_1 = arith.constant 0 : index
    %c0_2 = arith.constant 0 : index
    %0 = vector.load %arg2[%c0, %c0_0, %c0_1, %c0_2] : memref<1x8x16x8xf32, #tpu.memory_space<vmem>>, vector<1x8x16x8xf32>
    %1 = vector.shape_cast %0 : vector<1x8x16x8xf32> to vector<8x16x8xf32>
    %c0_3 = arith.constant 0 : index
    %c0_4 = arith.constant 0 : index
    %c0_5 = arith.constant 0 : index
    %c0_6 = arith.constant 0 : index
    %2 = vector.load %arg3[%c0_3, %c0_4, %c0_5, %c0_6] : memref<1x2x16x8xf32, #tpu.memory_space<vmem>>, vector<1x1x16x8xf32>
    %3 = vector.shape_cast %2 : vector<1x1x16x8xf32> to vector<1x16x8xf32>
    %c0_7 = arith.constant 0 : index
    %c1 = arith.constant 1 : index
    %c0_8 = arith.constant 0 : index
    %c0_9 = arith.constant 0 : index
    %4 = vector.load %arg3[%c0_7, %c1, %c0_8, %c0_9] : memref<1x2x16x8xf32, #tpu.memory_space<vmem>>, vector<1x1x16x8xf32>
    %5 = vector.shape_cast %4 : vector<1x1x16x8xf32> to vector<1x16x8xf32>
    %6 = tpu.concatenate %3, %1, %5 in 0 : vector<1x16x8xf32>, vector<8x16x8xf32>, vector<1x16x8xf32> -> vector<10x16x8xf32>
    %7 = vector.shape_cast %6 : vector<10x16x8xf32> to vector<160x8xf32>
    %8 = arith.truncf %7 : vector<160x8xf32> to vector<160x8xbf16>
    %c0_10 = arith.constant 0 : index
    %c0_11 = arith.constant 0 : index
    %9 = vector.load %arg4[%c0_10, %c0_11] : memref<8x4xbf16, #tpu.memory_space<vmem>>, vector<8x4xbf16>
    %cst = arith.constant dense<0.000000e+00> : vector<160x4xf32>
    %10 = tpu.matmul %8, %9, %cst {dimension_numbers = #tpu.dot_dimension_numbers<[1], [0], [0], [1], [0, 0, 1, 1], [], []>} : vector<160x8xbf16>, vector<8x4xbf16>, vector<160x4xf32> -> vector<160x4xf32>
    %c0_12 = arith.constant 0 : index
    %c0_13 = arith.constant 0 : index
    %11 = vector.load %arg5[%c0_12, %c0_13] : memref<1x4xf32, #tpu.memory_space<vmem>>, vector<1x4xf32>
    %12 = vector.broadcast %11 : vector<1x4xf32> to vector<160x4xf32>
    %13 = arith.addf %10, %12 : vector<160x4xf32>
    %cst_14 = arith.constant 0.000000e+00 : f32
    %14 = vector.broadcast %cst_14 : f32 to vector<160x4xf32>
    %15 = arith.cmpf ogt, %13, %14 : vector<160x4xf32>
    %cst_15 = arith.constant 0.00999999977 : f32
    %16 = vector.broadcast %cst_15 : f32 to vector<160x4xf32>
    %17 = arith.mulf %16, %13 : vector<160x4xf32>
    %18 = arith.select %15, %13, %17 : vector<160x4xi1>, vector<160x4xf32>
    %19 = vector.shape_cast %18 : vector<160x4xf32> to vector<10x16x4xf32>
    %20 = tpu.iota {dimensions = array<i32: 0>} : vector<10x1x1xi32>
    %c0_i32 = arith.constant 0 : i32
    %21 = vector.broadcast %c0_i32 : i32 to vector<10x1x1xi32>
    %22 = arith.cmpi ne, %20, %21 : vector<10x1x1xi32>
    %c0_i32_16 = arith.constant 0 : i32
    %23 = arith.cmpi sgt, %arg1, %c0_i32_16 : i32
    %24 = vector.broadcast %23 : i1 to vector<10x1x1xi1>
    %25 = arith.ori %22, %24 : vector<10x1x1xi1>
    %c9_i32 = arith.constant 9 : i32
    %26 = vector.broadcast %c9_i32 : i32 to vector<10x1x1xi32>
    %27 = arith.cmpi ne, %20, %26 : vector<10x1x1xi32>
    %c1_i32 = arith.constant 1 : i32
    %28 = arith.cmpi slt, %arg1, %c1_i32 : i32
    %29 = vector.broadcast %28 : i1 to vector<10x1x1xi1>
    %30 = arith.ori %27, %29 : vector<10x1x1xi1>
    %31 = arith.andi %25, %30 : vector<10x1x1xi1>
    %cst_17 = arith.constant 0.000000e+00 : f32
    %32 = vector.shape_cast %31 : vector<10x1x1xi1> to vector<10x1x1xi1>
    %33 = vector.broadcast %32 : vector<10x1x1xi1> to vector<10x16x4xi1>
    %34 = vector.broadcast %cst_17 : f32 to vector<10x16x4xf32>
    %35 = arith.select %33, %19, %34 : vector<10x16x4xi1>, vector<10x16x4xf32>
    %36 = arith.truncf %35 : vector<10x16x4xf32> to vector<10x16x4xbf16>
    %cst_18 = arith.constant 0.000000e+00 : bf16
    %37 = vector.broadcast %cst_18 : bf16 to vector<10x1x4xbf16>
    %c0_19 = arith.constant 0 : index
    %c0_20 = arith.constant 0 : index
    %c4 = arith.constant 4 : index
    %38 = vector.load %arg9[%c0_19, %c0_20, %c4] : memref<10x16x12xbf16, #tpu.memory_space<vmem>>, vector<10x16x4xbf16>
    tpu.vector_store %arg9[%c0_19, %c0_20, %c4], %36 {strides = array<i32>} : memref<10x16x12xbf16, #tpu.memory_space<vmem>>, vector<10x16x4xbf16>,
    %39 = vector.extract_strided_slice %36 {offsets = [0, 0, 0], sizes = [10, 15, 4], strides = [1, 1, 1]} : vector<10x16x4xbf16> to vector<10x15x4xbf16>
    %c0_21 = arith.constant 0 : index
    %c1_22 = arith.constant 1 : index
    %c0_23 = arith.constant 0 : index
    %40 = vector.load %arg9[%c0_21, %c1_22, %c0_23] : memref<10x16x12xbf16, #tpu.memory_space<vmem>>, vector<10x15x4xbf16>
    tpu.vector_store %arg9[%c0_21, %c1_22, %c0_23], %39 {strides = array<i32>} : memref<10x16x12xbf16, #tpu.memory_space<vmem>>, vector<10x15x4xbf16>,
    %c0_24 = arith.constant 0 : index
    %c0_25 = arith.constant 0 : index
    %c0_26 = arith.constant 0 : index
    %41 = vector.load %arg9[%c0_24, %c0_25, %c0_26] : memref<10x16x12xbf16, #tpu.memory_space<vmem>>, vector<10x1x4xbf16>
    tpu.vector_store %arg9[%c0_24, %c0_25, %c0_26], %37 {strides = array<i32>} : memref<10x16x12xbf16, #tpu.memory_space<vmem>>, vector<10x1x4xbf16>,
    %42 = vector.extract_strided_slice %36 {offsets = [0, 1, 0], sizes = [10, 15, 4], strides = [1, 1, 1]} : vector<10x16x4xbf16> to vector<10x15x4xbf16>
    %c0_27 = arith.constant 0 : index
    %c0_28 = arith.constant 0 : index
    %c8 = arith.constant 8 : index
    %43 = vector.load %arg9[%c0_27, %c0_28, %c8] : memref<10x16x12xbf16, #tpu.memory_space<vmem>>, vector<10x15x4xbf16>
    tpu.vector_store %arg9[%c0_27, %c0_28, %c8], %42 {strides = array<i32>} : memref<10x16x12xbf16, #tpu.memory_space<vmem>>, vector<10x15x4xbf16>,
    %c0_29 = arith.constant 0 : index
    %c15 = arith.constant 15 : index
    %c8_30 = arith.constant 8 : index
    %44 = vector.load %arg9[%c0_29, %c15, %c8_30] : memref<10x16x12xbf16, #tpu.memory_space<vmem>>, vector<10x1x4xbf16>
    tpu.vector_store %arg9[%c0_29, %c15, %c8_30], %37 {strides = array<i32>} : memref<10x16x12xbf16, #tpu.memory_space<vmem>>, vector<10x1x4xbf16>,
    %c0_31 = arith.constant 0 : index
    %c0_32 = arith.constant 0 : index
    %45 = vector.load %arg7[%c0_31, %c0_32] : memref<1x8xf32, #tpu.memory_space<vmem>>, vector<1x8xf32>
    %46 = vector.shape_cast %45 : vector<1x8xf32> to vector<1x8xf32>
    %47 = vector.broadcast %46 : vector<1x8xf32> to vector<128x8xf32>
    %c0_33 = arith.constant 0 : index
    %c0_34 = arith.constant 0 : index
    %c0_35 = arith.constant 0 : index
    %48 = vector.load %arg9[%c0_33, %c0_34, %c0_35] : memref<10x16x12xbf16, #tpu.memory_space<vmem>>, vector<8x16x12xbf16>
    %49 = vector.shape_cast %48 : vector<8x16x12xbf16> to vector<128x12xbf16>
    %c0_36 = arith.constant 0 : index
    %c0_37 = arith.constant 0 : index
    %c0_38 = arith.constant 0 : index
    %50 = vector.load %arg6[%c0_36, %c0_37, %c0_38] : memref<3x12x8xbf16, #tpu.memory_space<vmem>>, vector<1x12x8xbf16>
    %51 = vector.shape_cast %50 : vector<1x12x8xbf16> to vector<12x8xbf16>
    %cst_39 = arith.constant dense<0.000000e+00> : vector<128x8xf32>
    %52 = tpu.matmul %49, %51, %cst_39 {dimension_numbers = #tpu.dot_dimension_numbers<[1], [0], [0], [1], [0, 0, 1, 1], [], []>} : vector<128x12xbf16>, vector<12x8xbf16>, vector<128x8xf32> -> vector<128x8xf32>
    %53 = arith.addf %47, %52 : vector<128x8xf32>
    %c1_40 = arith.constant 1 : index
    %c0_41 = arith.constant 0 : index
    %c0_42 = arith.constant 0 : index
    %54 = vector.load %arg9[%c1_40, %c0_41, %c0_42] : memref<10x16x12xbf16, #tpu.memory_space<vmem>>, vector<8x16x12xbf16>
    %55 = vector.shape_cast %54 : vector<8x16x12xbf16> to vector<128x12xbf16>
    %c1_43 = arith.constant 1 : index
    %c0_44 = arith.constant 0 : index
    %c0_45 = arith.constant 0 : index
    %56 = vector.load %arg6[%c1_43, %c0_44, %c0_45] : memref<3x12x8xbf16, #tpu.memory_space<vmem>>, vector<1x12x8xbf16>
    %57 = vector.shape_cast %56 : vector<1x12x8xbf16> to vector<12x8xbf16>
    %cst_46 = arith.constant dense<0.000000e+00> : vector<128x8xf32>
    %58 = tpu.matmul %55, %57, %cst_46 {dimension_numbers = #tpu.dot_dimension_numbers<[1], [0], [0], [1], [0, 0, 1, 1], [], []>} : vector<128x12xbf16>, vector<12x8xbf16>, vector<128x8xf32> -> vector<128x8xf32>
    %59 = arith.addf %53, %58 : vector<128x8xf32>
    %c2 = arith.constant 2 : index
    %c0_47 = arith.constant 0 : index
    %c0_48 = arith.constant 0 : index
    %60 = vector.load %arg9[%c2, %c0_47, %c0_48] : memref<10x16x12xbf16, #tpu.memory_space<vmem>>, vector<8x16x12xbf16>
    %61 = vector.shape_cast %60 : vector<8x16x12xbf16> to vector<128x12xbf16>
    %c2_49 = arith.constant 2 : index
    %c0_50 = arith.constant 0 : index
    %c0_51 = arith.constant 0 : index
    %62 = vector.load %arg6[%c2_49, %c0_50, %c0_51] : memref<3x12x8xbf16, #tpu.memory_space<vmem>>, vector<1x12x8xbf16>
    %63 = vector.shape_cast %62 : vector<1x12x8xbf16> to vector<12x8xbf16>
    %cst_52 = arith.constant dense<0.000000e+00> : vector<128x8xf32>
    %64 = tpu.matmul %61, %63, %cst_52 {dimension_numbers = #tpu.dot_dimension_numbers<[1], [0], [0], [1], [0, 0, 1, 1], [], []>} : vector<128x12xbf16>, vector<12x8xbf16>, vector<128x8xf32> -> vector<128x8xf32>
    %65 = arith.addf %59, %64 : vector<128x8xf32>
    %cst_53 = arith.constant 0.000000e+00 : f32
    %66 = vector.broadcast %cst_53 : f32 to vector<128x8xf32>
    %67 = arith.cmpf ogt, %65, %66 : vector<128x8xf32>
    %cst_54 = arith.constant 0.00999999977 : f32
    %68 = vector.broadcast %cst_54 : f32 to vector<128x8xf32>
    %69 = arith.mulf %68, %65 : vector<128x8xf32>
    %70 = arith.select %67, %65, %69 : vector<128x8xi1>, vector<128x8xf32>
    %71 = vector.shape_cast %1 : vector<8x16x8xf32> to vector<128x8xf32>
    %72 = arith.addf %70, %71 : vector<128x8xf32>
    %73 = vector.shape_cast %72 : vector<128x8xf32> to vector<8x16x8xf32>
    %c0_55 = arith.constant 0 : index
    %c0_56 = arith.constant 0 : index
    %c0_57 = arith.constant 0 : index
    %c0_58 = arith.constant 0 : index
    %74 = vector.load %arg8[%c0_55, %c0_56, %c0_57, %c0_58] : memref<1x8x16x8xf32, #tpu.memory_space<vmem>>, vector<1x8x16x8xf32>
    %75 = vector.shape_cast %74 : vector<1x8x16x8xf32> to vector<8x16x8xf32>
    %76 = vector.shape_cast %73 : vector<8x16x8xf32> to vector<1x8x16x8xf32>
    tpu.vector_store %arg8[%c0_55, %c0_56, %c0_57, %c0_58], %76 {strides = array<i32>} : memref<1x8x16x8xf32, #tpu.memory_space<vmem>>, vector<1x8x16x8xf32>,
    return
  }
  func.func @transform_0(%arg0: i32, %arg1: i32) -> (i32, i32, i32, i32) {
    %c0_i32 = arith.constant 0 : i32
    %c0_i32_0 = arith.constant 0 : i32
    %c0_i32_1 = arith.constant 0 : i32
    return %arg0, %arg1, %c0_i32, %c0_i32_0 : i32, i32, i32, i32
  }
  func.func @transform_1(%arg0: i32, %arg1: i32) -> (i32, i32, i32, i32) {
    %c0_i32 = arith.constant 0 : i32
    %c0_i32_0 = arith.constant 0 : i32
    %c0_i32_1 = arith.constant 0 : i32
    return %arg0, %arg1, %c0_i32, %c0_i32_0 : i32, i32, i32, i32
  }
  func.func @transform_2(%arg0: i32, %arg1: i32) -> (i32, i32) {
    %c0_i32 = arith.constant 0 : i32
    %c0_i32_0 = arith.constant 0 : i32
    %c0_i32_1 = arith.constant 0 : i32
    return %c0_i32, %c0_i32_0 : i32, i32
  }
  func.func @transform_3(%arg0: i32, %arg1: i32) -> (i32, i32) {
    %c0_i32 = arith.constant 0 : i32
    %c0_i32_0 = arith.constant 0 : i32
    %c0_i32_1 = arith.constant 0 : i32
    return %c0_i32, %c0_i32_0 : i32, i32
  }
  func.func @transform_4(%arg0: i32, %arg1: i32) -> (i32, i32, i32) {
    %c0_i32 = arith.constant 0 : i32
    %c0_i32_0 = arith.constant 0 : i32
    %c0_i32_1 = arith.constant 0 : i32
    %c0_i32_2 = arith.constant 0 : i32
    return %c0_i32, %c0_i32_0, %c0_i32_1 : i32, i32, i32
  }
  func.func @transform_5(%arg0: i32, %arg1: i32) -> (i32, i32) {
    %c0_i32 = arith.constant 0 : i32
    %c0_i32_0 = arith.constant 0 : i32
    %c0_i32_1 = arith.constant 0 : i32
    return %c0_i32, %c0_i32_0 : i32, i32
  }
  func.func @transform_6(%arg0: i32, %arg1: i32) -> (i32, i32, i32, i32) {
    %c0_i32 = arith.constant 0 : i32
    %c0_i32_0 = arith.constant 0 : i32
    %c0_i32_1 = arith.constant 0 : i32
    return %arg0, %arg1, %c0_i32, %c0_i32_0 : i32, i32, i32, i32
  }
}

</mosaic_0001>

<llo_original>
// kernel: res_unit_pallas.1
$region0: #{res_unit_pallas.1}
  #allocation0 [shape = 'u32[]', space=smem, size = 0x4, offset = 0x4, fixed_abs, tag = 'smem constant byte address 0x4 - core index']
  #allocation1 [shape = 'u32[144,128]{1,0:T(1,128)}', space=vmem, size = 0x12000, scoped, tag = 'internal scratch']
  #allocation2 [shape = 'bf16[10,16,12]{2,1,0:T(16,128)(2,1)}', space=vmem, size = 0xa000, scoped, tag = 'scratch operand']
  %s0 = inlined_call_operand.vmem [shape: f32[2,16,16,8], index: 0, kind: input, shape index: {}]
  %s1 = inlined_call_operand.vmem [shape: f32[2,4,16,8], index: 1, kind: input, shape index: {}]
  %s2 = inlined_call_operand.vmem [shape: bf16[8,4], index: 2, kind: input, shape index: {}]
  %s3 = inlined_call_operand.vmem [shape: f32[1,4], index: 3, kind: input, shape index: {}]
  %s4 = inlined_call_operand.vmem [shape: bf16[3,12,8], index: 4, kind: input, shape index: {}]
  %s5 = inlined_call_operand.vmem [shape: f32[1,8], index: 5, kind: input, shape index: {}]
  %s6 = inlined_call_operand.vmem [shape: f32[2,16,16,8], index: 6, kind: output, shape index: {}]
  %s7 = sld [smem:[#allocation0]]
  $region57: #{res_unit_pallas.1} parent=0
    _
  %s9 = ssub.s32 1, %s7
  %s10 = scalar_select 0, %s9, %s7
  loop: start=0, step=1, limit=6
  $region2: #{res_unit_pallas.1} parent=0 // loop_pre_header
    _
  $region3: #{res_unit_pallas.1} parent=0 // loop_header
    %s12 = sphi 0, %s16
    %p13 = scmp.ge.s32.totalorder %s12, 6
    %s19 = sphi 0, %s31
    %s20 = sphi 0, %s27
    %s21 = sphi 0, %s19
    %s22 = sphi 0, %s20
    %s23 = sphi 0, %s21
    %s24 = sphi 0, %s22
    %s36 = sphi 0, %s38
    %s39 = sphi 0, %s36
    %s40 = sphi 0, %s39
    %s56 = sphi 0, %s40
    %s64 = sphi 0, %s66
    %s67 = sphi 0, %s64
    %s68 = sphi 0, %s67
    %s84 = sphi 0, %s68
    %s88 = sphi 0, %s88
    %s90 = sphi 0, %s88
    %s91 = sphi 0, %s90
    %s105 = sphi 0, %s91
    %s109 = sphi 0, %s109
    %s111 = sphi 0, %s109
    %s112 = sphi 0, %s111
    %s126 = sphi 0, %s112
    %s130 = sphi 0, %s130
    %s132 = sphi 0, %s130
    %s133 = sphi 0, %s132
    %s147 = sphi 0, %s133
    %s151 = sphi 0, %s151
    %s153 = sphi 0, %s151
    %s154 = sphi 0, %s153
    %s168 = sphi 0, %s154
    %s176 = sphi 0, %s178
    %s179 = sphi 0, %s176
    %s180 = sphi 0, %s179
    %s196 = sphi 0, %s180
  $region4: #{res_unit_pallas.1} parent=0 // loop_header_branch
    %15 = sbr.rel (%p13) target = $region8
  $region5: #{res_unit_pallas.1} parent=0 // loop_body
    %s17 = ssub.s32 %s12, 1
    %s18 = ssub.s32 %s12, 2
    %s25 = sadd.s32 1, %s20
    %p26 = scmp.ge.s32.totalorder %s25, 2
    %s27 = scalar_select %p26, 0, %s25
    %s28 = sadd.s32 1, %s19
    %s29 = scalar_select %p26, %s28, %s19
    %p30 = scmp.ge.s32.totalorder %s29, 2
    %s31 = scalar_select %p30, 0, %s29
    %s32 = ssub.s32 %s19, %s31
    %s33 = ssub.s32 %s20, %s27
    %s34 = sor.u32 %s32, %s33
    %p35 = scmp.eq.s32.totalorder %s34, 0
    %s37 = sadd.s32 %s36, 1
    %s38 = scalar_select %p35, %s36, %s37
    %p41 = pneg %p35
    %p42 = scmp.eq.s32.totalorder %s12, 3
    %p43 = por %p41, %p42
    %p44 = scmp.ne.s32.totalorder %s36, %s39
    %p45 = scmp.eq.s32.totalorder %s12, 0
    %p46 = por %p44, %p45
    %p47 = scmp.ne.s32.totalorder %s36, %s39
    %p48 = scmp.eq.s32.totalorder %s17, 3
    %p49 = por %p47, %p48
    %p50 = scmp.ne.s32.totalorder %s39, %s40
    %p51 = scmp.eq.s32.totalorder %s17, 0
    %p52 = por %p50, %p51
    %p53 = scmp.ne.s32.totalorder %s39, %s40
    %p54 = scmp.eq.s32.totalorder %s18, 3
    %p55 = por %p53, %p54
    %p57 = scmp.ne.s32.totalorder %s40, %s56
    %p58 = scmp.eq.s32.totalorder %s18, 0
    %p59 = por %p57, %p58
    %s60 = ssub.s32 %s19, %s31
    %s61 = ssub.s32 %s20, %s27
    %s62 = sor.u32 %s60, %s61
    %p63 = scmp.eq.s32.totalorder %s62, 0
    %s65 = sadd.s32 %s64, 1
    %s66 = scalar_select %p63, %s64, %s65
    %p69 = pneg %p63
    %p70 = scmp.eq.s32.totalorder %s12, 3
    %p71 = por %p69, %p70
    %p72 = scmp.ne.s32.totalorder %s64, %s67
    %p73 = scmp.eq.s32.totalorder %s12, 0
    %p74 = por %p72, %p73
    %p75 = scmp.ne.s32.totalorder %s64, %s67
    %p76 = scmp.eq.s32.totalorder %s17, 3
    %p77 = por %p75, %p76
    %p78 = scmp.ne.s32.totalorder %s67, %s68
    %p79 = scmp.eq.s32.totalorder %s17, 0
    %p80 = por %p78, %p79
    %p81 = scmp.ne.s32.totalorder %s67, %s68
    %p82 = scmp.eq.s32.totalorder %s18, 3
    %p83 = por %p81, %p82
    %p85 = scmp.ne.s32.totalorder %s68, %s84
    %p86 = scmp.eq.s32.totalorder %s18, 0
    %p87 = por %p85, %p86
    %s89 = sadd.s32 %s88, 1
    %p92 = scmp.eq.s32.totalorder %s12, 3
    %p93 = scmp.ne.s32.totalorder %s88, %s90
    %p94 = scmp.eq.s32.totalorder %s12, 0
    %p95 = por %p93, %p94
    %p96 = scmp.ne.s32.totalorder %s88, %s90
    %p97 = scmp.eq.s32.totalorder %s17, 3
    %p98 = por %p96, %p97
    %p99 = scmp.ne.s32.totalorder %s90, %s91
    %p100 = scmp.eq.s32.totalorder %s17, 0
    %p101 = por %p99, %p100
    %p102 = scmp.ne.s32.totalorder %s90, %s91
    %p103 = scmp.eq.s32.totalorder %s18, 3
    %p104 = por %p102, %p103
    %p106 = scmp.ne.s32.totalorder %s91, %s105
    %p107 = scmp.eq.s32.totalorder %s18, 0
    %p108 = por %p106, %p107
    %s110 = sadd.s32 %s109, 1
    %p113 = scmp.eq.s32.totalorder %s12, 3
    %p114 = scmp.ne.s32.totalorder %s109, %s111
    %p115 = scmp.eq.s32.totalorder %s12, 0
    %p116 = por %p114, %p115
    %p117 = scmp.ne.s32.totalorder %s109, %s111
    %p118 = scmp.eq.s32.totalorder %s17, 3
    %p119 = por %p117, %p118
    %p120 = scmp.ne.s32.totalorder %s111, %s112
    %p121 = scmp.eq.s32.totalorder %s17, 0
    %p122 = por %p120, %p121
    %p123 = scmp.ne.s32.totalorder %s111, %s112
    %p124 = scmp.eq.s32.totalorder %s18, 3
    %p125 = por %p123, %p124
    %p127 = scmp.ne.s32.totalorder %s112, %s126
    %p128 = scmp.eq.s32.totalorder %s18, 0
    %p129 = por %p127, %p128
    %s131 = sadd.s32 %s130, 1
    %p134 = scmp.eq.s32.totalorder %s12, 3
    %p135 = scmp.ne.s32.totalorder %s130, %s132
    %p136 = scmp.eq.s32.totalorder %s12, 0
    %p137 = por %p135, %p136
    %p138 = scmp.ne.s32.totalorder %s130, %s132
    %p139 = scmp.eq.s32.totalorder %s17, 3
    %p140 = por %p138, %p139
    %p141 = scmp.ne.s32.totalorder %s132, %s133
    %p142 = scmp.eq.s32.totalorder %s17, 0
    %p143 = por %p141, %p142
    %p144 = scmp.ne.s32.totalorder %s132, %s133
    %p145 = scmp.eq.s32.totalorder %s18, 3
    %p146 = por %p144, %p145
    %p148 = scmp.ne.s32.totalorder %s133, %s147
    %p149 = scmp.eq.s32.totalorder %s18, 0
    %p150 = por %p148, %p149
    %s152 = sadd.s32 %s151, 1
    %p155 = scmp.eq.s32.totalorder %s12, 3
    %p156 = scmp.ne.s32.totalorder %s151, %s153
    %p157 = scmp.eq.s32.totalorder %s12, 0
    %p158 = por %p156, %p157
    %p159 = scmp.ne.s32.totalorder %s151, %s153
    %p160 = scmp.eq.s32.totalorder %s17, 3
    %p161 = por %p159, %p160
    %p162 = scmp.ne.s32.totalorder %s153, %s154
    %p163 = scmp.eq.s32.totalorder %s17, 0
    %p164 = por %p162, %p163
    %p165 = scmp.ne.s32.totalorder %s153, %s154
    %p166 = scmp.eq.s32.totalorder %s18, 3
    %p167 = por %p165, %p166
    %p169 = scmp.ne.s32.totalorder %s154, %s168
    %p170 = scmp.eq.s32.totalorder %s18, 0
    %p171 = por %p169, %p170
    %s172 = ssub.s32 %s19, %s31
    %s173 = ssub.s32 %s20, %s27
    %s174 = sor.u32 %s172, %s173
    %p175 = scmp.eq.s32.totalorder %s174, 0
    %s177 = sadd.s32 %s176, 1
    %s178 = scalar_select %p175, %s176, %s177
    %p181 = pneg %p175
    %p182 = scmp.eq.s32.totalorder %s12, 3
    %p183 = por %p181, %p182
    %p184 = scmp.ne.s32.totalorder %s176, %s179
    %p185 = scmp.eq.s32.totalorder %s12, 0
    %p186 = por %p184, %p185
    %p187 = scmp.ne.s32.totalorder %s176, %s179
    %p188 = scmp.eq.s32.totalorder %s17, 3
    %p189 = por %p187, %p188
    %p190 = scmp.ne.s32.totalorder %s179, %s180
    %p191 = scmp.eq.s32.totalorder %s17, 0
    %p192 = por %p190, %p191
    %p193 = scmp.ne.s32.totalorder %s179, %s180
    %p194 = scmp.eq.s32.totalorder %s18, 3
    %p195 = por %p193, %p194
    %p197 = scmp.ne.s32.totalorder %s180, %s196
    %p198 = scmp.eq.s32.totalorder %s18, 0
    %p199 = por %p197, %p198
    %p200 = scmp.le.s32.totalorder 1, %s12
    %p201 = scmp.lt.s32.totalorder %s12, 5
    %p202 = pnand %p200, %p201
    %p203 = pneg %p202
    // Predicated region
    $region9: #{res_unit_pallas.1} parent=5 // pred_check
      _
    $region10: #{res_unit_pallas.1} parent=5 // pred_check_branch
      %205 = sbr.rel (%p202) target = $region12
    $region11: #{res_unit_pallas.1} parent=5 // pred_region
      %s206 = ssub.s32 %s12, 1
      // Predicated region
      $region13: #{res_unit_pallas.1} parent=11 // pred_check
        %p207 = pneg %p101
      $region14: #{res_unit_pallas.1} parent=11 // pred_check_branch
        %209 = sbr.rel (%p207) target = $region16
      $region15: #{res_unit_pallas.1} parent=11 // pred_region
        _
      $region16: #{res_unit_pallas.1} parent=11 // pred_fallthru
        _
      // Predicated region
      $region17: #{res_unit_pallas.1} parent=11 // pred_check
        %p210 = pneg %p122
      $region18: #{res_unit_pallas.1} parent=11 // pred_check_branch
        %212 = sbr.rel (%p210) target = $region20
      $region19: #{res_unit_pallas.1} parent=11 // pred_region
        _
      $region20: #{res_unit_pallas.1} parent=11 // pred_fallthru
        _
      // Predicated region
      $region21: #{res_unit_pallas.1} parent=11 // pred_check
        %p213 = pneg %p143
      $region22: #{res_unit_pallas.1} parent=11 // pred_check_branch
        %215 = sbr.rel (%p213) target = $region24
      $region23: #{res_unit_pallas.1} parent=11 // pred_region
        _
      $region24: #{res_unit_pallas.1} parent=11 // pred_fallthru
        _
      // Predicated region
      $region25: #{res_unit_pallas.1} parent=11 // pred_check
        %p216 = pneg %p164
      $region26: #{res_unit_pallas.1} parent=11 // pred_check_branch
        %218 = sbr.rel (%p216) target = $region28
      $region27: #{res_unit_pallas.1} parent=11 // pred_region
        _
      $region28: #{res_unit_pallas.1} parent=11 // pred_fallthru
        _
    $region12: #{res_unit_pallas.1} parent=5 // pred_fallthru
      _
    %p219 = scmp.lt.s32.totalorder %s12, 4
    // Predicated region
    $region29: #{res_unit_pallas.1} parent=5 // pred_check
      %p220 = pneg %p219
    $region30: #{res_unit_pallas.1} parent=5 // pred_check_branch
      %222 = sbr.rel (%p220) target = $region32
    $region31: #{res_unit_pallas.1} parent=5 // pred_region
      // Predicated region
      $region33: #{res_unit_pallas.1} parent=31 // pred_check
        %p223 = pneg %p46
      $region34: #{res_unit_pallas.1} parent=31 // pred_check_branch
        %225 = sbr.rel (%p223) target = $region36
      $region35: #{res_unit_pallas.1} parent=31 // pred_region
        %s226 = smul.u32 8, %s20
        %p227 = scmp.lt.s32.totalorder %s19, 1
        %s228 = scalar_select %p227, %s19, 1
        %p229 = scmp.lt.s32.totalorder %s226, 15
        %s230 = scalar_select %p229, %s226, 15
        %s231 = smul.addr %s230, 2
        %s232 = smul.addr %s228, 32
        %s233 = sadd.s32 %s231, %s232
        %s234 = smul.addr %s233, 8
        %s235 = scalar_lea.vmem %s0, %s234
        %s236 = smul.u32 8, %s20
      $region36: #{res_unit_pallas.1} parent=31 // pred_fallthru
        _
      // Predicated region
      $region37: #{res_unit_pallas.1} parent=31 // pred_check
        %p237 = pneg %p74
      $region38: #{res_unit_pallas.1} parent=31 // pred_check_branch
        %239 = sbr.rel (%p237) target = $region40
      $region39: #{res_unit_pallas.1} parent=31 // pred_region
        %s240 = smul.u32 2, %s20
        %p241 = scmp.lt.s32.totalorder %s19, 1
        %s242 = scalar_select %p241, %s19, 1
        %p243 = scmp.lt.s32.totalorder %s240, 3
        %s244 = scalar_select %p243, %s240, 3
        %s245 = smul.addr %s244, 2
        %s246 = smul.addr %s242, 8
        %s247 = sadd.s32 %s245, %s246
        %s248 = smul.addr %s247, 8
        %s249 = scalar_lea.vmem %s1, %s248
        %s250 = smul.u32 2, %s20
      $region40: #{res_unit_pallas.1} parent=31 // pred_fallthru
        _
    $region32: #{res_unit_pallas.1} parent=5 // pred_fallthru
      _
    %p251 = scmp.le.s32.totalorder 1, %s12
    %p252 = scmp.lt.s32.totalorder %s12, 5
    %p253 = pnand %p251, %p252
    %p254 = pneg %p253
    // Predicated region
    $region41: #{res_unit_pallas.1} parent=5 // pred_check
      _
    $region42: #{res_unit_pallas.1} parent=5 // pred_check_branch
      %256 = sbr.rel (%p253) target = $region44
    $region43: #{res_unit_pallas.1} parent=5 // pred_region
      %s257 = ssub.s32 %s12, 1
      %s258 = smul.u32 8, %s22
      %p259 = scmp.lt.s32.totalorder %s21, 1
      %s260 = scalar_select %p259, %s21, 1
      %p261 = scmp.lt.s32.totalorder %s258, 15
      %s262 = scalar_select %p261, %s258, 15
      %s263 = smul.addr %s262, 2
      %s264 = smul.addr %s260, 32
      %s265 = sadd.s32 %s263, %s264
      %s266 = smul.addr %s265, 8
      %s267 = scalar_lea.vmem %s0, %s266
      %p268 = pneg %p52
      %p269 = pneg %p49
      %s270 = smul.u32 2, %s22
      %p271 = scmp.lt.s32.totalorder %s21, 1
      %s272 = scalar_select %p271, %s21, 1
      %p273 = scmp.lt.s32.totalorder %s270, 3
      %s274 = scalar_select %p273, %s270, 3
      %s275 = smul.addr %s274, 2
      %s276 = smul.addr %s272, 8
      %s277 = sadd.s32 %s275, %s276
      %s278 = smul.addr %s277, 8
      %s279 = scalar_lea.vmem %s1, %s278
      %p280 = pneg %p80
      %p281 = pneg %p77
      %p282 = pneg %p101
      %p283 = pneg %p98
      %p284 = pneg %p122
      %p285 = pneg %p119
      %p286 = pneg %p143
      %p287 = pneg %p140
      %p288 = pneg %p164
      %p289 = pneg %p161
      %p290 = pneg %p192
      %p291 = pneg %p189
      %s292 = smul.u32 8, %s22
      %p293 = scmp.lt.s32.totalorder %s21, 1
      %s294 = scalar_select %p293, %s21, 1
      %p295 = scmp.lt.s32.totalorder %s292, 15
      %s296 = scalar_select %p295, %s292, 15
      %s297 = smul.addr %s296, 2
      %s298 = smul.addr %s294, 32
      %s299 = sadd.s32 %s297, %s298
      %s300 = smul.addr %s299, 8
      %s301 = scalar_lea.vmem %s6, %s300
      %s302 = smul.u32 8, %s22
      %p303 = scmp.lt.s32.totalorder %s21, 1
      %s304 = scalar_select %p303, %s21, 1
      %p305 = scmp.lt.s32.totalorder %s302, 15
      %s306 = scalar_select %p305, %s302, 15
      %s307 = smul.addr %s306, 2
      %s308 = smul.addr %s304, 32
      %s309 = sadd.s32 %s307, %s308
      %s310 = smul.addr %s309, 8
      %s311 = scalar_lea.vmem %s0, %s310
      %s312 = smul.u32 8, %s22
      %s313 = smul.u32 2, %s22
      %p314 = scmp.lt.s32.totalorder %s21, 1
      %s315 = scalar_select %p314, %s21, 1
      %p316 = scmp.lt.s32.totalorder %s313, 3
      %s317 = scalar_select %p316, %s313, 3
      %s318 = smul.addr %s317, 2
      %s319 = smul.addr %s315, 8
      %s320 = sadd.s32 %s318, %s319
      %s321 = smul.addr %s320, 8
      %s322 = scalar_lea.vmem %s1, %s321
      %s323 = smul.u32 2, %s22
      %s324 = smul.u32 8, %s22
      %p325 = scmp.lt.s32.totalorder %s21, 1
      %s326 = scalar_select %p325, %s21, 1
      %p327 = scmp.lt.s32.totalorder %s324, 15
      %s328 = scalar_select %p327, %s324, 15
      %s329 = smul.addr %s328, 2
      %s330 = smul.addr %s326, 32
      %s331 = sadd.s32 %s329, %s330
      %s332 = smul.addr %s331, 8
      %s333 = scalar_lea.vmem %s6, %s332
      %s334 = smul.u32 8, %s22
      %v336 = vld [vmem:[%s311] sm:$0xff]
      %v337 = vld [vmem:[%s311 + $0x8] sm:$0xff]
      %v338 = vld [vmem:[%s311 + $0x10] sm:$0xff]
      %v339 = vld [vmem:[%s311 + $0x18] sm:$0xff]
      %v340 = vld [vmem:[%s311 + $0x20] sm:$0xff]
      %v341 = vld [vmem:[%s311 + $0x28] sm:$0xff]
      %v342 = vld [vmem:[%s311 + $0x30] sm:$0xff]
      %v343 = vld [vmem:[%s311 + $0x38] sm:$0xff]
      %v344 = vld [vmem:[%s311 + $0x40] sm:$0xff]
      %v345 = vld [vmem:[%s311 + $0x48] sm:$0xff]
      %v346 = vld [vmem:[%s311 + $0x50] sm:$0xff]
      %v347 = vld [vmem:[%s311 + $0x58] sm:$0xff]
      %v348 = vld [vmem:[%s311 + $0x60] sm:$0xff]
      %v349 = vld [vmem:[%s311 + $0x68] sm:$0xff]
      %v350 = vld [vmem:[%s311 + $0x70] sm:$0xff]
      %v351 = vld [vmem:[%s311 + $0x78] sm:$0xff]
      %v352 = vld [vmem:[%s322] sm:$0xff]
      %v353 = vld [vmem:[%s322 + $0x8] sm:$0xff]
      %s354 = scalar_lea.vmem %s322, 16
      %v355 = vld [vmem:[%s354] sm:$0xff]
      %v356 = vld [vmem:[%s354 + $0x8] sm:$0xff]
      %v357 = vpack.c.bf16 %v353, %v352
      %v358 = vpack.c.bf16 %v337, %v336
      %v359 = vpack.c.bf16 %v339, %v338
      %v360 = vpack.c.bf16 %v341, %v340
      %v361 = vpack.c.bf16 %v343, %v342
      %v362 = vpack.c.bf16 %v345, %v344
      %v363 = vpack.c.bf16 %v347, %v346
      %v364 = vpack.c.bf16 %v349, %v348
      %v365 = vpack.c.bf16 %v351, %v350
      %v366 = vpack.c.bf16 %v356, %v355
      %v367 = vld [vmem:[%s2] sm:$0xf]
      %v368 = vld [vmem:[%s3] sm:$0x1]
      %v370 = vlaneseq
      %v371 = vshrl.u32 %v370, 7
      %v372 = vsub.s32 0, %v371
      %v373 = vrot.slane %v368, %v372
      %vm375 = vcmask 64512
      %v377 = vsel %vm375, %v357, 0
      %v380 = vsel %vm375, %v358, 0
      %v383 = vsel %vm375, %v359, 0
      %v386 = vsel %vm375, %v360, 0
      %v389 = vsel %vm375, %v361, 0
      %v392 = vsel %vm375, %v362, 0
      %v395 = vsel %vm375, %v363, 0
      %v398 = vsel %vm375, %v364, 0
      %v401 = vsel %vm375, %v365, 0
      %v404 = vsel %vm375, %v366, 0
      %vm406 = vcmask 1043456
      %v408 = vsel %vm406, %v367, 0
      %410 = vmatprep.subr.bf16.mxu0 0
      %411 = vmatpush1.bf16.msra.mxu0 %v408
      %412 = vmatprep.subr.bf16.mxu0 0
      %413 = vmatpush1.bf16.msra.mxu0 0
      %414 = vmatprep.subr.bf16.mxu0 0
      %415 = vmatpush1.bf16.msra.mxu0 0
      %416 = vmatprep.subr.bf16.mxu0 0
      %417 = vmatpush1.bf16.msra.mxu0 0
      %418 = vmatprep.subr.bf16.mxu0 0
      %419 = vmatpush1.bf16.msra.mxu0 0
      %420 = vmatprep.subr.bf16.mxu0 0
      %421 = vmatpush1.bf16.msra.mxu0 0
      %422 = vmatprep.subr.bf16.mxu0 0
      %423 = vmatpush1.bf16.msra.mxu0 0
      %424 = vmatprep.subr.bf16.mxu0 0
      %425 = vmatpush1.bf16.msra.mxu0 0
      %426 = vmatprep.subr.bf16.mxu0 0
      %427 = vmatpush1.bf16.msra.mxu0 0
      %428 = vmatprep.subr.bf16.mxu0 0
      %429 = vmatpush1.bf16.msra.mxu0 0
      %430 = vmatprep.subr.bf16.mxu0 0
      %431 = vmatpush1.bf16.msra.mxu0 0
      %432 = vmatprep.subr.bf16.mxu0 0
      %433 = vmatpush1.bf16.msra.mxu0 0
      %434 = vmatprep.subr.bf16.mxu0 0
      %435 = vmatpush1.bf16.msra.mxu0 0
      %436 = vmatprep.subr.bf16.mxu0 0
      %437 = vmatpush1.bf16.msra.mxu0 0
      %438 = vmatprep.subr.bf16.mxu0 0
      %439 = vmatpush1.bf16.msra.mxu0 0
      %440 = vmatprep.subr.bf16.mxu0 0
      %441 = vmatpush1.bf16.msra.mxu0 0
      %442 = vmatprep.mubr.bf16.mxu0 0
      %443 = vmatmul.mubr.bf16.gmra.mrb[0].mxu0 %v377
      %v444 = vpop.f32.mrb[0].mxu0
      %v445 = vadd.f32 %v373, %v444
      %v446 = vpop.f32.mrb[0].mxu0
      %v447 = vpop.f32.mrb[0].mxu0
      %v448 = vadd.f32 %v373, %v447
      %v449 = vpop.f32.mrb[0].mxu0
      %450 = vmatprep.mubr.bf16.mxu0 0
      %451 = vmatmul.mubr.bf16.gmra.mrb[0].mxu0 %v380
      %v452 = vpop.f32.mrb[0].mxu0
      %v453 = vadd.f32 %v373, %v452
      %v454 = vpop.f32.mrb[0].mxu0
      %v455 = vpop.f32.mrb[0].mxu0
      %v456 = vadd.f32 %v373, %v455
      %v457 = vpop.f32.mrb[0].mxu0
      %458 = vmatprep.mubr.bf16.mxu0 0
      %459 = vmatmul.mubr.bf16.gmra.mrb[0].mxu0 %v383
      %v460 = vpop.f32.mrb[0].mxu0
      %v461 = vadd.f32 %v373, %v460
      %v462 = vpop.f32.mrb[0].mxu0
      %v463 = vpop.f32.mrb[0].mxu0
      %v464 = vadd.f32 %v373, %v463
      %v465 = vpop.f32.mrb[0].mxu0
      %466 = vmatprep.mubr.bf16.mxu0 0
      %467 = vmatmul.mubr.bf16.gmra.mrb[0].mxu0 %v386
      %v468 = vpop.f32.mrb[0].mxu0
      %v469 = vadd.f32 %v373, %v468
      %v470 = vpop.f32.mrb[0].mxu0
      %v471 = vpop.f32.mrb[0].mxu0
      %v472 = vadd.f32 %v373, %v471
      %v473 = vpop.f32.mrb[0].mxu0
      %474 = vmatprep.mubr.bf16.mxu0 0
      %475 = vmatmul.mubr.bf16.gmra.mrb[0].mxu0 %v389
      %v476 = vpop.f32.mrb[0].mxu0
      %v477 = vadd.f32 %v373, %v476
      %v478 = vpop.f32.mrb[0].mxu0
      %v479 = vpop.f32.mrb[0].mxu0
      %v480 = vadd.f32 %v373, %v479
      %v481 = vpop.f32.mrb[0].mxu0
      %482 = vmatprep.mubr.bf16.mxu0 0
      %483 = vmatmul.mubr.bf16.gmra.mrb[0].mxu0 %v392
      %v484 = vpop.f32.mrb[0].mxu0
      %v485 = vadd.f32 %v373, %v484
      %v486 = vpop.f32.mrb[0].mxu0
      %v487 = vpop.f32.mrb[0].mxu0
      %v488 = vadd.f32 %v373, %v487
      %v489 = vpop.f32.mrb[0].mxu0
      %490 = vmatprep.mubr.bf16.mxu0 0
      %491 = vmatmul.mubr.bf16.gmra.mrb[0].mxu0 %v395
      %v492 = vpop.f32.mrb[0].mxu0
      %v493 = vadd.f32 %v373, %v492
      %v494 = vpop.f32.mrb[0].mxu0
      %v495 = vpop.f32.mrb[0].mxu0
      %v496 = vadd.f32 %v373, %v495
      %v497 = vpop.f32.mrb[0].mxu0
      %498 = vmatprep.mubr.bf16.mxu0 0
      %499 = vmatmul.mubr.bf16.gmra.mrb[0].mxu0 %v398
      %v500 = vpop.f32.mrb[0].mxu0
      %v501 = vadd.f32 %v373, %v500
      %v502 = vpop.f32.mrb[0].mxu0
      %v503 = vpop.f32.mrb[0].mxu0
      %v504 = vadd.f32 %v373, %v503
      %v505 = vpop.f32.mrb[0].mxu0
      %506 = vmatprep.mubr.bf16.mxu0 0
      %507 = vmatmul.mubr.bf16.gmra.mrb[0].mxu0 %v401
      %v508 = vpop.f32.mrb[0].mxu0
      %v509 = vadd.f32 %v373, %v508
      %v510 = vpop.f32.mrb[0].mxu0
      %v511 = vpop.f32.mrb[0].mxu0
      %v512 = vadd.f32 %v373, %v511
      %v513 = vpop.f32.mrb[0].mxu0
      %514 = vmatprep.mubr.bf16.mxu0 0
      %515 = vmatmul.mubr.bf16.gmra.mrb[0].mxu0 %v404
      %v516 = vpop.f32.mrb[0].mxu0
      %v517 = vadd.f32 %v373, %v516
      %v518 = vpop.f32.mrb[0].mxu0
      %v519 = vpop.f32.mrb[0].mxu0
      %v520 = vadd.f32 %v373, %v519
      %v521 = vpop.f32.mrb[0].mxu0
      %522 = vdwg.mxu0
      %vm523 = vcmp.gt.f32.partialorder %v445, 0.0
      %vm524 = vcmp.gt.f32.partialorder %v448, 0.0
      %vm525 = vcmp.gt.f32.partialorder %v453, 0.0
      %vm526 = vcmp.gt.f32.partialorder %v456, 0.0
      %vm527 = vcmp.gt.f32.partialorder %v461, 0.0
      %vm528 = vcmp.gt.f32.partialorder %v464, 0.0
      %vm529 = vcmp.gt.f32.partialorder %v469, 0.0
      %vm530 = vcmp.gt.f32.partialorder %v472, 0.0
      %vm531 = vcmp.gt.f32.partialorder %v477, 0.0
      %vm532 = vcmp.gt.f32.partialorder %v480, 0.0
      %vm533 = vcmp.gt.f32.partialorder %v485, 0.0
      %vm534 = vcmp.gt.f32.partialorder %v488, 0.0
      %vm535 = vcmp.gt.f32.partialorder %v493, 0.0
      %vm536 = vcmp.gt.f32.partialorder %v496, 0.0
      %vm537 = vcmp.gt.f32.partialorder %v501, 0.0
      %vm538 = vcmp.gt.f32.partialorder %v504, 0.0
      %vm539 = vcmp.gt.f32.partialorder %v509, 0.0
      %vm540 = vcmp.gt.f32.partialorder %v512, 0.0
      %vm541 = vcmp.gt.f32.partialorder %v517, 0.0
      %vm542 = vcmp.gt.f32.partialorder %v520, 0.0
      %v543 = vmul.f32 %v445, 0.01
      %v544 = vmul.f32 %v448, 0.01
      %v545 = vmul.f32 %v453, 0.01
      %v546 = vmul.f32 %v456, 0.01
      %v547 = vmul.f32 %v461, 0.01
      %v548 = vmul.f32 %v464, 0.01
      %v549 = vmul.f32 %v469, 0.01
      %v550 = vmul.f32 %v472, 0.01
      %v551 = vmul.f32 %v477, 0.01
      %v552 = vmul.f32 %v480, 0.01
      %v553 = vmul.f32 %v485, 0.01
      %v554 = vmul.f32 %v488, 0.01
      %v555 = vmul.f32 %v493, 0.01
      %v556 = vmul.f32 %v496, 0.01
      %v557 = vmul.f32 %v501, 0.01
      %v558 = vmul.f32 %v504, 0.01
      %v559 = vmul.f32 %v509, 0.01
      %v560 = vmul.f32 %v512, 0.01
      %v561 = vmul.f32 %v517, 0.01
      %v562 = vmul.f32 %v520, 0.01
      %v563 = vsel %vm523, %v445, %v543
      %v564 = vsel %vm524, %v448, %v544
      %v565 = vsel %vm525, %v453, %v545
      %v566 = vsel %vm526, %v456, %v546
      %v567 = vsel %vm527, %v461, %v547
      %v568 = vsel %vm528, %v464, %v548
      %v569 = vsel %vm529, %v469, %v549
      %v570 = vsel %vm530, %v472, %v550
      %v571 = vsel %vm531, %v477, %v551
      %v572 = vsel %vm532, %v480, %v552
      %v573 = vsel %vm533, %v485, %v553
      %v574 = vsel %vm534, %v488, %v554
      %v575 = vsel %vm535, %v493, %v555
      %v576 = vsel %vm536, %v496, %v556
      %v577 = vsel %vm537, %v501, %v557
      %v578 = vsel %vm538, %v504, %v558
      %v579 = vsel %vm539, %v509, %v559
      %v580 = vsel %vm540, %v512, %v560
      %v581 = vsel %vm541, %v517, %v561
      %v582 = vsel %vm542, %v520, %v562
      %p583 = scmp.gt.s32.totalorder %s22, 0
      %s584 = scalar_select %p583, 1, 0
      %v585 = vstv %s584
      %vm586 = vcmp.eq.s32.totalorder %v585, 1
      %p587 = scmp.lt.s32.totalorder %s22, 1
      %s588 = scalar_select %p587, 1, 0
      %v589 = vstv %s588
      %vm590 = vcmp.eq.s32.totalorder %v589, 1
      %v591 = vsel %vm586, 1, 0
      %v592 = vsel %vm590, 1, 0
      %vm593 = vcmp.eq.s32.totalorder %v591, 1
      %vm594 = vcmp.eq.s32.totalorder %v592, 1
      %v595 = vsel %vm593, %v563, 0.0
      %v596 = vsel %vm593, %v564, 0.0
      %v597 = vsel 1, %v565, 0.0
      %v598 = vsel 1, %v566, 0.0
      %v599 = vsel 1, %v567, 0.0
      %v600 = vsel 1, %v568, 0.0
      %v601 = vsel 1, %v569, 0.0
      %v602 = vsel 1, %v570, 0.0
      %v603 = vsel 1, %v571, 0.0
      %v604 = vsel 1, %v572, 0.0
      %v605 = vsel 1, %v573, 0.0
      %v606 = vsel 1, %v574, 0.0
      %v607 = vsel 1, %v575, 0.0
      %v608 = vsel 1, %v576, 0.0
      %v609 = vsel 1, %v577, 0.0
      %v610 = vsel 1, %v578, 0.0
      %v611 = vsel 1, %v579, 0.0
      %v612 = vsel 1, %v580, 0.0
      %v613 = vsel %vm594, %v581, 0.0
      %v614 = vsel %vm594, %v582, 0.0
      %v615 = vpack.c.bf16 %v596, %v595
      %v616 = vpack.c.bf16 %v598, %v597
      %v617 = vpack.c.bf16 %v600, %v599
      %v618 = vpack.c.bf16 %v602, %v601
      %v619 = vpack.c.bf16 %v604, %v603
      %v620 = vpack.c.bf16 %v606, %v605
      %v621 = vpack.c.bf16 %v608, %v607
      %v622 = vpack.c.bf16 %v610, %v609
      %v623 = vpack.c.bf16 %v612, %v611
      %v624 = vpack.c.bf16 %v614, %v613
      %635 = vrot.lane.b32.xlu0 %v615, 4
      %v636 = vpop.permute.xlu0 %635
      %637 = vrot.lane.b32.xlu0 %v616, 4
      %v638 = vpop.permute.xlu0 %637
      %639 = vrot.lane.b32.xlu0 %v617, 4
      %v640 = vpop.permute.xlu0 %639
      %641 = vrot.lane.b32.xlu0 %v618, 4
      %v642 = vpop.permute.xlu0 %641
      %643 = vrot.lane.b32.xlu0 %v619, 4
      %v644 = vpop.permute.xlu0 %643
      %645 = vrot.lane.b32.xlu0 %v620, 4
      %v646 = vpop.permute.xlu0 %645
      %647 = vrot.lane.b32.xlu0 %v621, 4
      %v648 = vpop.permute.xlu0 %647
      %649 = vrot.lane.b32.xlu0 %v622, 4
      %v650 = vpop.permute.xlu0 %649
      %651 = vrot.lane.b32.xlu0 %v623, 4
      %v652 = vpop.permute.xlu0 %651
      %653 = vrot.lane.b32.xlu0 %v624, 4
      %v654 = vpop.permute.xlu0 %653
      %vm665 = vcmask 64544
      %666 = vst.msk [vmem:[#allocation2] sm:$0xff] %vm665, %v636
      %667 = vst.msk [vmem:[#allocation2 + $0x8] sm:$0xff] %vm665, %v638
      %668 = vst.msk [vmem:[#allocation2 + $0x10] sm:$0xff] %vm665, %v640
      %669 = vst.msk [vmem:[#allocation2 + $0x18] sm:$0xff] %vm665, %v642
      %670 = vst.msk [vmem:[#allocation2 + $0x20] sm:$0xff] %vm665, %v644
      %671 = vst.msk [vmem:[#allocation2 + $0x28] sm:$0xff] %vm665, %v646
      %672 = vst.msk [vmem:[#allocation2 + $0x30] sm:$0xff] %vm665, %v648
      %673 = vst.msk [vmem:[#allocation2 + $0x38] sm:$0xff] %vm665, %v650
      %674 = vst.msk [vmem:[#allocation2 + $0x40] sm:$0xff] %vm665, %v652
      %675 = vst.msk [vmem:[#allocation2 + $0x48] sm:$0xff] %vm665, %v654
      %v677 = vshrl.u32 %v615, 16
      %v679 = vrot.slane %v677, 7
      %v680 = vshll.u32 %v615, 16
      %v682 = vor.u32 %v679, %v680
      %v684 = vshrl.u32 %v616, 16
      %v686 = vrot.slane %v684, 7
      %v687 = vshll.u32 %v616, 16
      %v689 = vor.u32 %v686, %v687
      %v691 = vshrl.u32 %v617, 16
      %v693 = vrot.slane %v691, 7
      %v694 = vshll.u32 %v617, 16
      %v696 = vor.u32 %v693, %v694
      %v698 = vshrl.u32 %v618, 16
      %v700 = vrot.slane %v698, 7
      %v701 = vshll.u32 %v618, 16
      %v703 = vor.u32 %v700, %v701
      %v705 = vshrl.u32 %v619, 16
      %v707 = vrot.slane %v705, 7
      %v708 = vshll.u32 %v619, 16
      %v710 = vor.u32 %v707, %v708
      %v712 = vshrl.u32 %v620, 16
      %v714 = vrot.slane %v712, 7
      %v715 = vshll.u32 %v620, 16
      %v717 = vor.u32 %v714, %v715
      %v719 = vshrl.u32 %v621, 16
      %v721 = vrot.slane %v719, 7
      %v722 = vshll.u32 %v621, 16
      %v724 = vor.u32 %v721, %v722
      %v726 = vshrl.u32 %v622, 16
      %v728 = vrot.slane %v726, 7
      %v729 = vshll.u32 %v622, 16
      %v731 = vor.u32 %v728, %v729
      %v733 = vshrl.u32 %v623, 16
      %v735 = vrot.slane %v733, 7
      %v736 = vshll.u32 %v623, 16
      %v738 = vor.u32 %v735, %v736
      %v740 = vshrl.u32 %v624, 16
      %v742 = vrot.slane %v740, 7
      %v743 = vshll.u32 %v624, 16
      %v745 = vor.u32 %v742, %v743
      %vm756 = vcmask 31744
      %vm757 = vsmask.f32 7938
      %vm758 = vmand %vm756, %vm757
      %v759 = vld [vmem:[#allocation2] sm:$0xff]
      %v760 = vsel %vm758, %v682, %v759
      %761 = vst [vmem:[#allocation2] sm:$0xff] %v760
      %v762 = vld [vmem:[#allocation2 + $0x8] sm:$0xff]
      %v763 = vsel %vm758, %v689, %v762
      %764 = vst [vmem:[#allocation2 + $0x8] sm:$0xff] %v763
      %v765 = vld [vmem:[#allocation2 + $0x10] sm:$0xff]
      %v766 = vsel %vm758, %v696, %v765
      %767 = vst [vmem:[#allocation2 + $0x10] sm:$0xff] %v766
      %v768 = vld [vmem:[#allocation2 + $0x18] sm:$0xff]
      %v769 = vsel %vm758, %v703, %v768
      %770 = vst [vmem:[#allocation2 + $0x18] sm:$0xff] %v769
      %v771 = vld [vmem:[#allocation2 + $0x20] sm:$0xff]
      %v772 = vsel %vm758, %v710, %v771
      %773 = vst [vmem:[#allocation2 + $0x20] sm:$0xff] %v772
      %v774 = vld [vmem:[#allocation2 + $0x28] sm:$0xff]
      %v775 = vsel %vm758, %v717, %v774
      %776 = vst [vmem:[#allocation2 + $0x28] sm:$0xff] %v775
      %v777 = vld [vmem:[#allocation2 + $0x30] sm:$0xff]
      %v778 = vsel %vm758, %v724, %v777
      %779 = vst [vmem:[#allocation2 + $0x30] sm:$0xff] %v778
      %v780 = vld [vmem:[#allocation2 + $0x38] sm:$0xff]
      %v781 = vsel %vm758, %v731, %v780
      %782 = vst [vmem:[#allocation2 + $0x38] sm:$0xff] %v781
      %v783 = vld [vmem:[#allocation2 + $0x40] sm:$0xff]
      %v784 = vsel %vm758, %v738, %v783
      %785 = vst [vmem:[#allocation2 + $0x40] sm:$0xff] %v784
      %v786 = vld [vmem:[#allocation2 + $0x48] sm:$0xff]
      %v787 = vsel %vm758, %v745, %v786
      %788 = vst [vmem:[#allocation2 + $0x48] sm:$0xff] %v787
      %vm789 = vcmask 24576
      %vm790 = vsmask.f32 256
      %vm791 = vmand %vm789, %vm790
      %v792 = vld [vmem:[#allocation2] sm:$0x1]
      %v793 = vsel %vm791, 0, %v792
      %794 = vst [vmem:[#allocation2] sm:$0x1] %v793
      %v795 = vld [vmem:[#allocation2 + $0x8] sm:$0x1]
      %v796 = vsel %vm791, 0, %v795
      %797 = vst [vmem:[#allocation2 + $0x8] sm:$0x1] %v796
      %v798 = vld [vmem:[#allocation2 + $0x10] sm:$0x1]
      %v799 = vsel %vm791, 0, %v798
      %800 = vst [vmem:[#allocation2 + $0x10] sm:$0x1] %v799
      %v801 = vld [vmem:[#allocation2 + $0x18] sm:$0x1]
      %v802 = vsel %vm791, 0, %v801
      %803 = vst [vmem:[#allocation2 + $0x18] sm:$0x1] %v802
      %v804 = vld [vmem:[#allocation2 + $0x20] sm:$0x1]
      %v805 = vsel %vm791, 0, %v804
      %806 = vst [vmem:[#allocation2 + $0x20] sm:$0x1] %v805
      %v807 = vld [vmem:[#allocation2 + $0x28] sm:$0x1]
      %v808 = vsel %vm791, 0, %v807
      %809 = vst [vmem:[#allocation2 + $0x28] sm:$0x1] %v808
      %v810 = vld [vmem:[#allocation2 + $0x30] sm:$0x1]
      %v811 = vsel %vm791, 0, %v810
      %812 = vst [vmem:[#allocation2 + $0x30] sm:$0x1] %v811
      %v813 = vld [vmem:[#allocation2 + $0x38] sm:$0x1]
      %v814 = vsel %vm791, 0, %v813
      %815 = vst [vmem:[#allocation2 + $0x38] sm:$0x1] %v814
      %v816 = vld [vmem:[#allocation2 + $0x40] sm:$0x1]
      %v817 = vsel %vm791, 0, %v816
      %818 = vst [vmem:[#allocation2 + $0x40] sm:$0x1] %v817
      %v819 = vld [vmem:[#allocation2 + $0x48] sm:$0x1]
      %v820 = vsel %vm791, 0, %v819
      %821 = vst [vmem:[#allocation2 + $0x48] sm:$0x1] %v820
      %v822 = vrot.slane %v680, 1
      %v823 = vor.u32 %v677, %v822
      %v824 = vrot.slane %v687, 1
      %v825 = vor.u32 %v684, %v824
      %v826 = vrot.slane %v694, 1
      %v827 = vor.u32 %v691, %v826
      %v828 = vrot.slane %v701, 1
      %v829 = vor.u32 %v698, %v828
      %v830 = vrot.slane %v708, 1
      %v831 = vor.u32 %v705, %v830
      %v832 = vrot.slane %v715, 1
      %v833 = vor.u32 %v712, %v832
      %v834 = vrot.slane %v722, 1
      %v835 = vor.u32 %v719, %v834
      %v836 = vrot.slane %v729, 1
      %v837 = vor.u32 %v726, %v836
      %v838 = vrot.slane %v736, 1
      %v839 = vor.u32 %v733, %v838
      %v840 = vrot.slane %v743, 1
      %v841 = vor.u32 %v740, %v840
      %842 = vrot.lane.b32.xlu0 %v823, 8
      %v843 = vpop.permute.xlu0 %842
      %844 = vrot.lane.b32.xlu0 %v825, 8
      %v845 = vpop.permute.xlu0 %844
      %846 = vrot.lane.b32.xlu0 %v827, 8
      %v847 = vpop.permute.xlu0 %846
      %848 = vrot.lane.b32.xlu0 %v829, 8
      %v849 = vpop.permute.xlu0 %848
      %850 = vrot.lane.b32.xlu0 %v831, 8
      %v851 = vpop.permute.xlu0 %850
      %852 = vrot.lane.b32.xlu0 %v833, 8
      %v853 = vpop.permute.xlu0 %852
      %854 = vrot.lane.b32.xlu0 %v835, 8
      %v855 = vpop.permute.xlu0 %854
      %856 = vrot.lane.b32.xlu0 %v837, 8
      %v857 = vpop.permute.xlu0 %856
      %858 = vrot.lane.b32.xlu0 %v839, 8
      %v859 = vpop.permute.xlu0 %858
      %860 = vrot.lane.b32.xlu0 %v841, 8
      %v861 = vpop.permute.xlu0 %860
      %vm872 = vcmask 97344
      %vm873 = vsmask.f32 7424
      %vm874 = vmand %vm872, %vm873
      %v875 = vld [vmem:[#allocation2] sm:$0xff]
      %v876 = vsel %vm874, %v843, %v875
      %877 = vst [vmem:[#allocation2] sm:$0xff] %v876
      %v878 = vld [vmem:[#allocation2 + $0x8] sm:$0xff]
      %v879 = vsel %vm874, %v845, %v878
      %880 = vst [vmem:[#allocation2 + $0x8] sm:$0xff] %v879
      %v881 = vld [vmem:[#allocation2 + $0x10] sm:$0xff]
      %v882 = vsel %vm874, %v847, %v881
      %883 = vst [vmem:[#allocation2 + $0x10] sm:$0xff] %v882
      %v884 = vld [vmem:[#allocation2 + $0x18] sm:$0xff]
      %v885 = vsel %vm874, %v849, %v884
      %886 = vst [vmem:[#allocation2 + $0x18] sm:$0xff] %v885
      %v887 = vld [vmem:[#allocation2 + $0x20] sm:$0xff]
      %v888 = vsel %vm874, %v851, %v887
      %889 = vst [vmem:[#allocation2 + $0x20] sm:$0xff] %v888
      %v890 = vld [vmem:[#allocation2 + $0x28] sm:$0xff]
      %v891 = vsel %vm874, %v853, %v890
      %892 = vst [vmem:[#allocation2 + $0x28] sm:$0xff] %v891
      %v893 = vld [vmem:[#allocation2 + $0x30] sm:$0xff]
      %v894 = vsel %vm874, %v855, %v893
      %895 = vst [vmem:[#allocation2 + $0x30] sm:$0xff] %v894
      %v896 = vld [vmem:[#allocation2 + $0x38] sm:$0xff]
      %v897 = vsel %vm874, %v857, %v896
      %898 = vst [vmem:[#allocation2 + $0x38] sm:$0xff] %v897
      %v899 = vld [vmem:[#allocation2 + $0x40] sm:$0xff]
      %v900 = vsel %vm874, %v859, %v899
      %901 = vst [vmem:[#allocation2 + $0x40] sm:$0xff] %v900
      %v902 = vld [vmem:[#allocation2 + $0x48] sm:$0xff]
      %v903 = vsel %vm874, %v861, %v902
      %904 = vst [vmem:[#allocation2 + $0x48] sm:$0xff] %v903
      %vm905 = vcmask 97351
      %vm906 = vsmask.f32 7966
      %vm907 = vmand %vm905, %vm906
      %v908 = vld [vmem:[#allocation2] sm:$0x80]
      %v909 = vsel %vm907, 0, %v908
      %910 = vst [vmem:[#allocation2] sm:$0x80] %v909
      %v911 = vld [vmem:[#allocation2 + $0x8] sm:$0x80]
      %v912 = vsel %vm907, 0, %v911
      %913 = vst [vmem:[#allocation2 + $0x8] sm:$0x80] %v912
      %v914 = vld [vmem:[#allocation2 + $0x10] sm:$0x80]
      %v915 = vsel %vm907, 0, %v914
      %916 = vst [vmem:[#allocation2 + $0x10] sm:$0x80] %v915
      %v917 = vld [vmem:[#allocation2 + $0x18] sm:$0x80]
      %v918 = vsel %vm907, 0, %v917
      %919 = vst [vmem:[#allocation2 + $0x18] sm:$0x80] %v918
      %v920 = vld [vmem:[#allocation2 + $0x20] sm:$0x80]
      %v921 = vsel %vm907, 0, %v920
      %922 = vst [vmem:[#allocation2 + $0x20] sm:$0x80] %v921
      %v923 = vld [vmem:[#allocation2 + $0x28] sm:$0x80]
      %v924 = vsel %vm907, 0, %v923
      %925 = vst [vmem:[#allocation2 + $0x28] sm:$0x80] %v924
      %v926 = vld [vmem:[#allocation2 + $0x30] sm:$0x80]
      %v927 = vsel %vm907, 0, %v926
      %928 = vst [vmem:[#allocation2 + $0x30] sm:$0x80] %v927
      %v929 = vld [vmem:[#allocation2 + $0x38] sm:$0x80]
      %v930 = vsel %vm907, 0, %v929
      %931 = vst [vmem:[#allocation2 + $0x38] sm:$0x80] %v930
      %v932 = vld [vmem:[#allocation2 + $0x40] sm:$0x80]
      %v933 = vsel %vm907, 0, %v932
      %934 = vst [vmem:[#allocation2 + $0x40] sm:$0x80] %v933
      %v935 = vld [vmem:[#allocation2 + $0x48] sm:$0x80]
      %v936 = vsel %vm907, 0, %v935
      %937 = vst [vmem:[#allocation2 + $0x48] sm:$0x80] %v936
      %v938 = vld [vmem:[%s5] sm:$0x1]
      %v940 = vlaneseq
      %v941 = vshrl.u32 %v940, 7
      %v942 = vsub.s32 0, %v941
      %v943 = vrot.slane %v938, %v942
      %v945 = vld [vmem:[#allocation2] sm:$0xff]
      %v946 = vld [vmem:[#allocation2 + $0x8] sm:$0xff]
      %v947 = vld [vmem:[#allocation2 + $0x10] sm:$0xff]
      %v948 = vld [vmem:[#allocation2 + $0x18] sm:$0xff]
      %v949 = vld [vmem:[#allocation2 + $0x20] sm:$0xff]
      %v950 = vld [vmem:[#allocation2 + $0x28] sm:$0xff]
      %v951 = vld [vmem:[#allocation2 + $0x30] sm:$0xff]
      %v952 = vld [vmem:[#allocation2 + $0x38] sm:$0xff]
      %v953 = vld [vmem:[%s4] sm:$0xf]
      %v954 = vld [vmem:[%s4 + $0x4] sm:$0x3]
      %v957 = vunpack.c.l.b16 %v953
      %v958 = vunpack.c.l.b16 %v954
      %v959 = vpack.c.b16 %v958, %v957
      %vm960 = vcmask 97280
      %v962 = vsel %vm960, %v945, 0
      %v965 = vsel %vm960, %v946, 0
      %v968 = vsel %vm960, %v947, 0
      %v971 = vsel %vm960, %v948, 0
      %v974 = vsel %vm960, %v949, 0
      %v977 = vsel %vm960, %v950, 0
      %v980 = vsel %vm960, %v951, 0
      %v983 = vsel %vm960, %v952, 0
      %vm985 = vcmask 1045504
      %v987 = vsel %vm985, %v959, 0
      %989 = vmatprep.subr.bf16.mxu0 0
      %990 = vmatpush1.bf16.msra.mxu0 %v987
      %991 = vmatprep.subr.bf16.mxu0 0
      %992 = vmatpush1.bf16.msra.mxu0 0
      %993 = vmatprep.subr.bf16.mxu0 0
      %994 = vmatpush1.bf16.msra.mxu0 0
      %995 = vmatprep.subr.bf16.mxu0 0
      %996 = vmatpush1.bf16.msra.mxu0 0
      %997 = vmatprep.subr.bf16.mxu0 0
      %998 = vmatpush1.bf16.msra.mxu0 0
      %999 = vmatprep.subr.bf16.mxu0 0
      %1000 = vmatpush1.bf16.msra.mxu0 0
      %1001 = vmatprep.subr.bf16.mxu0 0
      %1002 = vmatpush1.bf16.msra.mxu0 0
      %1003 = vmatprep.subr.bf16.mxu0 0
      %1004 = vmatpush1.bf16.msra.mxu0 0
      %1005 = vmatprep.subr.bf16.mxu0 0
      %1006 = vmatpush1.bf16.msra.mxu0 0
      %1007 = vmatprep.subr.bf16.mxu0 0
      %1008 = vmatpush1.bf16.msra.mxu0 0
      %1009 = vmatprep.subr.bf16.mxu0 0
      %1010 = vmatpush1.bf16.msra.mxu0 0
      %1011 = vmatprep.subr.bf16.mxu0 0
      %1012 = vmatpush1.bf16.msra.mxu0 0
      %1013 = vmatprep.subr.bf16.mxu0 0
      %1014 = vmatpush1.bf16.msra.mxu0 0
      %1015 = vmatprep.subr.bf16.mxu0 0
      %1016 = vmatpush1.bf16.msra.mxu0 0
      %1017 = vmatprep.subr.bf16.mxu0 0
      %1018 = vmatpush1.bf16.msra.mxu0 0
      %1019 = vmatprep.subr.bf16.mxu0 0
      %1020 = vmatpush1.bf16.msra.mxu0 0
      %1021 = vmatprep.mubr.bf16.mxu0 0
      %1022 = vmatmul.mubr.bf16.gmra.mrb[0].mxu0 %v962
      %v1023 = vpop.f32.mrb[0].mxu0
      %v1024 = vadd.f32 0.0, %v1023
      %v1025 = vpop.f32.mrb[0].mxu0
      %v1026 = vpop.f32.mrb[0].mxu0
      %v1027 = vadd.f32 0.0, %v1026
      %v1028 = vpop.f32.mrb[0].mxu0
      %1029 = vmatprep.mubr.bf16.mxu0 0
      %1030 = vmatmul.mubr.bf16.gmra.mrb[0].mxu0 %v965
      %v1031 = vpop.f32.mrb[0].mxu0
      %v1032 = vadd.f32 0.0, %v1031
      %v1033 = vpop.f32.mrb[0].mxu0
      %v1034 = vpop.f32.mrb[0].mxu0
      %v1035 = vadd.f32 0.0, %v1034
      %v1036 = vpop.f32.mrb[0].mxu0
      %1037 = vmatprep.mubr.bf16.mxu0 0
      %1038 = vmatmul.mubr.bf16.gmra.mrb[0].mxu0 %v968
      %v1039 = vpop.f32.mrb[0].mxu0
      %v1040 = vadd.f32 0.0, %v1039
      %v1041 = vpop.f32.mrb[0].mxu0
      %v1042 = vpop.f32.mrb[0].mxu0
      %v1043 = vadd.f32 0.0, %v1042
      %v1044 = vpop.f32.mrb[0].mxu0
      %1045 = vmatprep.mubr.bf16.mxu0 0
      %1046 = vmatmul.mubr.bf16.gmra.mrb[0].mxu0 %v971
      %v1047 = vpop.f32.mrb[0].mxu0
      %v1048 = vadd.f32 0.0, %v1047
      %v1049 = vpop.f32.mrb[0].mxu0
      %v1050 = vpop.f32.mrb[0].mxu0
      %v1051 = vadd.f32 0.0, %v1050
      %v1052 = vpop.f32.mrb[0].mxu0
      %1053 = vmatprep.mubr.bf16.mxu0 0
      %1054 = vmatmul.mubr.bf16.gmra.mrb[0].mxu0 %v974
      %v1055 = vpop.f32.mrb[0].mxu0
      %v1056 = vadd.f32 0.0, %v1055
      %v1057 = vpop.f32.mrb[0].mxu0
      %v1058 = vpop.f32.mrb[0].mxu0
      %v1059 = vadd.f32 0.0, %v1058
      %v1060 = vpop.f32.mrb[0].mxu0
      %1061 = vmatprep.mubr.bf16.mxu0 0
      %1062 = vmatmul.mubr.bf16.gmra.mrb[0].mxu0 %v977
      %v1063 = vpop.f32.mrb[0].mxu0
      %v1064 = vadd.f32 0.0, %v1063
      %v1065 = vpop.f32.mrb[0].mxu0
      %v1066 = vpop.f32.mrb[0].mxu0
      %v1067 = vadd.f32 0.0, %v1066
      %v1068 = vpop.f32.mrb[0].mxu0
      %1069 = vmatprep.mubr.bf16.mxu0 0
      %1070 = vmatmul.mubr.bf16.gmra.mrb[0].mxu0 %v980
      %v1071 = vpop.f32.mrb[0].mxu0
      %v1072 = vadd.f32 0.0, %v1071
      %v1073 = vpop.f32.mrb[0].mxu0
      %v1074 = vpop.f32.mrb[0].mxu0
      %v1075 = vadd.f32 0.0, %v1074
      %v1076 = vpop.f32.mrb[0].mxu0
      %1077 = vmatprep.mubr.bf16.mxu0 0
      %1078 = vmatmul.mubr.bf16.gmra.mrb[0].mxu0 %v983
      %v1079 = vpop.f32.mrb[0].mxu0
      %v1080 = vadd.f32 0.0, %v1079
      %v1081 = vpop.f32.mrb[0].mxu0
      %v1082 = vpop.f32.mrb[0].mxu0
      %v1083 = vadd.f32 0.0, %v1082
      %v1084 = vpop.f32.mrb[0].mxu0
      %1085 = vdwg.mxu0
      %v1086 = vadd.f32 %v943, %v1024
      %v1087 = vadd.f32 %v943, %v1027
      %v1088 = vadd.f32 %v943, %v1032
      %v1089 = vadd.f32 %v943, %v1035
      %v1090 = vadd.f32 %v943, %v1040
      %v1091 = vadd.f32 %v943, %v1043
      %v1092 = vadd.f32 %v943, %v1048
      %v1093 = vadd.f32 %v943, %v1051
      %v1094 = vadd.f32 %v943, %v1056
      %v1095 = vadd.f32 %v943, %v1059
      %v1096 = vadd.f32 %v943, %v1064
      %v1097 = vadd.f32 %v943, %v1067
      %v1098 = vadd.f32 %v943, %v1072
      %v1099 = vadd.f32 %v943, %v1075
      %v1100 = vadd.f32 %v943, %v1080
      %v1101 = vadd.f32 %v943, %v1083
      %s1102 = scalar_lea.vmem [#allocation2], 8
      %v1103 = vld [vmem:[%s1102] sm:$0xff]
      %v1104 = vld [vmem:[%s1102 + $0x8] sm:$0xff]
      %v1105 = vld [vmem:[%s1102 + $0x10] sm:$0xff]
      %v1106 = vld [vmem:[%s1102 + $0x18] sm:$0xff]
      %v1107 = vld [vmem:[%s1102 + $0x20] sm:$0xff]
      %v1108 = vld [vmem:[%s1102 + $0x28] sm:$0xff]
      %v1109 = vld [vmem:[%s1102 + $0x30] sm:$0xff]
      %v1110 = vld [vmem:[%s1102 + $0x38] sm:$0xff]
      %s1111 = scalar_lea.vmem %s4, 8
      %v1112 = vld [vmem:[%s1111] sm:$0xf]
      %v1113 = vld [vmem:[%s1111 + $0x4] sm:$0x3]
      %v1116 = vunpack.c.l.b16 %v1112
      %v1117 = vunpack.c.l.b16 %v1113
      %v1118 = vpack.c.b16 %v1117, %v1116
      %v1120 = vsel %vm960, %v1103, 0
      %v1123 = vsel %vm960, %v1104, 0
      %v1126 = vsel %vm960, %v1105, 0
      %v1129 = vsel %vm960, %v1106, 0
      %v1132 = vsel %vm960, %v1107, 0
      %v1135 = vsel %vm960, %v1108, 0
      %v1138 = vsel %vm960, %v1109, 0
      %v1141 = vsel %vm960, %v1110, 0
      %v1144 = vsel %vm985, %v1118, 0
      %1146 = vmatprep.subr.bf16.mxu0 0
      %1147 = vmatpush1.bf16.msra.mxu0 %v1144
      %1148 = vmatprep.subr.bf16.mxu0 0
      %1149 = vmatpush1.bf16.msra.mxu0 0
      %1150 = vmatprep.subr.bf16.mxu0 0
      %1151 = vmatpush1.bf16.msra.mxu0 0
      %1152 = vmatprep.subr.bf16.mxu0 0
      %1153 = vmatpush1.bf16.msra.mxu0 0
      %1154 = vmatprep.subr.bf16.mxu0 0
      %1155 = vmatpush1.bf16.msra.mxu0 0
      %1156 = vmatprep.subr.bf16.mxu0 0
      %1157 = vmatpush1.bf16.msra.mxu0 0
      %1158 = vmatprep.subr.bf16.mxu0 0
      %1159 = vmatpush1.bf16.msra.mxu0 0
      %1160 = vmatprep.subr.bf16.mxu0 0
      %1161 = vmatpush1.bf16.msra.mxu0 0
      %1162 = vmatprep.subr.bf16.mxu0 0
      %1163 = vmatpush1.bf16.msra.mxu0 0
      %1164 = vmatprep.subr.bf16.mxu0 0
      %1165 = vmatpush1.bf16.msra.mxu0 0
      %1166 = vmatprep.subr.bf16.mxu0 0
      %1167 = vmatpush1.bf16.msra.mxu0 0
      %1168 = vmatprep.subr.bf16.mxu0 0
      %1169 = vmatpush1.bf16.msra.mxu0 0
      %1170 = vmatprep.subr.bf16.mxu0 0
      %1171 = vmatpush1.bf16.msra.mxu0 0
      %1172 = vmatprep.subr.bf16.mxu0 0
      %1173 = vmatpush1.bf16.msra.mxu0 0
      %1174 = vmatprep.subr.bf16.mxu0 0
      %1175 = vmatpush1.bf16.msra.mxu0 0
      %1176 = vmatprep.subr.bf16.mxu0 0
      %1177 = vmatpush1.bf16.msra.mxu0 0
      %1178 = vmatprep.mubr.bf16.mxu0 0
      %1179 = vmatmul.mubr.bf16.gmra.mrb[0].mxu0 %v1120
      %v1180 = vpop.f32.mrb[0].mxu0
      %v1181 = vadd.f32 0.0, %v1180
      %v1182 = vpop.f32.mrb[0].mxu0
      %v1183 = vpop.f32.mrb[0].mxu0
      %v1184 = vadd.f32 0.0, %v1183
      %v1185 = vpop.f32.mrb[0].mxu0
      %1186 = vmatprep.mubr.bf16.mxu0 0
      %1187 = vmatmul.mubr.bf16.gmra.mrb[0].mxu0 %v1123
      %v1188 = vpop.f32.mrb[0].mxu0
      %v1189 = vadd.f32 0.0, %v1188
      %v1190 = vpop.f32.mrb[0].mxu0
      %v1191 = vpop.f32.mrb[0].mxu0
      %v1192 = vadd.f32 0.0, %v1191
      %v1193 = vpop.f32.mrb[0].mxu0
      %1194 = vmatprep.mubr.bf16.mxu0 0
      %1195 = vmatmul.mubr.bf16.gmra.mrb[0].mxu0 %v1126
      %v1196 = vpop.f32.mrb[0].mxu0
      %v1197 = vadd.f32 0.0, %v1196
      %v1198 = vpop.f32.mrb[0].mxu0
      %v1199 = vpop.f32.mrb[0].mxu0
      %v1200 = vadd.f32 0.0, %v1199
      %v1201 = vpop.f32.mrb[0].mxu0
      %1202 = vmatprep.mubr.bf16.mxu0 0
      %1203 = vmatmul.mubr.bf16.gmra.mrb[0].mxu0 %v1129
      %v1204 = vpop.f32.mrb[0].mxu0
      %v1205 = vadd.f32 0.0, %v1204
      %v1206 = vpop.f32.mrb[0].mxu0
      %v1207 = vpop.f32.mrb[0].mxu0
      %v1208 = vadd.f32 0.0, %v1207
      %v1209 = vpop.f32.mrb[0].mxu0
      %1210 = vmatprep.mubr.bf16.mxu0 0
      %1211 = vmatmul.mubr.bf16.gmra.mrb[0].mxu0 %v1132
      %v1212 = vpop.f32.mrb[0].mxu0
      %v1213 = vadd.f32 0.0, %v1212
      %v1214 = vpop.f32.mrb[0].mxu0
      %v1215 = vpop.f32.mrb[0].mxu0
      %v1216 = vadd.f32 0.0, %v1215
      %v1217 = vpop.f32.mrb[0].mxu0
      %1218 = vmatprep.mubr.bf16.mxu0 0
      %1219 = vmatmul.mubr.bf16.gmra.mrb[0].mxu0 %v1135
      %v1220 = vpop.f32.mrb[0].mxu0
      %v1221 = vadd.f32 0.0, %v1220
      %v1222 = vpop.f32.mrb[0].mxu0
      %v1223 = vpop.f32.mrb[0].mxu0
      %v1224 = vadd.f32 0.0, %v1223
      %v1225 = vpop.f32.mrb[0].mxu0
      %1226 = vmatprep.mubr.bf16.mxu0 0
      %1227 = vmatmul.mubr.bf16.gmra.mrb[0].mxu0 %v1138
      %v1228 = vpop.f32.mrb[0].mxu0
      %v1229 = vadd.f32 0.0, %v1228
      %v1230 = vpop.f32.mrb[0].mxu0
      %v1231 = vpop.f32.mrb[0].mxu0
      %v1232 = vadd.f32 0.0, %v1231
      %v1233 = vpop.f32.mrb[0].mxu0
      %1234 = vmatprep.mubr.bf16.mxu0 0
      %1235 = vmatmul.mubr.bf16.gmra.mrb[0].mxu0 %v1141
      %v1236 = vpop.f32.mrb[0].mxu0
      %v1237 = vadd.f32 0.0, %v1236
      %v1238 = vpop.f32.mrb[0].mxu0
      %v1239 = vpop.f32.mrb[0].mxu0
      %v1240 = vadd.f32 0.0, %v1239
      %v1241 = vpop.f32.mrb[0].mxu0
      %1242 = vdwg.mxu0
      %v1243 = vadd.f32 %v1086, %v1181
      %v1244 = vadd.f32 %v1087, %v1184
      %v1245 = vadd.f32 %v1088, %v1189
      %v1246 = vadd.f32 %v1089, %v1192
      %v1247 = vadd.f32 %v1090, %v1197
      %v1248 = vadd.f32 %v1091, %v1200
      %v1249 = vadd.f32 %v1092, %v1205
      %v1250 = vadd.f32 %v1093, %v1208
      %v1251 = vadd.f32 %v1094, %v1213
      %v1252 = vadd.f32 %v1095, %v1216
      %v1253 = vadd.f32 %v1096, %v1221
      %v1254 = vadd.f32 %v1097, %v1224
      %v1255 = vadd.f32 %v1098, %v1229
      %v1256 = vadd.f32 %v1099, %v1232
      %v1257 = vadd.f32 %v1100, %v1237
      %v1258 = vadd.f32 %v1101, %v1240
      %s1259 = scalar_lea.vmem [#allocation2], 16
      %v1260 = vld [vmem:[%s1259] sm:$0xff]
      %v1261 = vld [vmem:[%s1259 + $0x8] sm:$0xff]
      %v1262 = vld [vmem:[%s1259 + $0x10] sm:$0xff]
      %v1263 = vld [vmem:[%s1259 + $0x18] sm:$0xff]
      %v1264 = vld [vmem:[%s1259 + $0x20] sm:$0xff]
      %v1265 = vld [vmem:[%s1259 + $0x28] sm:$0xff]
      %v1266 = vld [vmem:[%s1259 + $0x30] sm:$0xff]
      %v1267 = vld [vmem:[%s1259 + $0x38] sm:$0xff]
      %s1268 = scalar_lea.vmem %s4, 16
      %v1269 = vld [vmem:[%s1268] sm:$0xf]
      %v1270 = vld [vmem:[%s1268 + $0x4] sm:$0x3]
      %v1273 = vunpack.c.l.b16 %v1269
      %v1274 = vunpack.c.l.b16 %v1270
      %v1275 = vpack.c.b16 %v1274, %v1273
      %v1277 = vsel %vm960, %v1260, 0
      %v1280 = vsel %vm960, %v1261, 0
      %v1283 = vsel %vm960, %v1262, 0
      %v1286 = vsel %vm960, %v1263, 0
      %v1289 = vsel %vm960, %v1264, 0
      %v1292 = vsel %vm960, %v1265, 0
      %v1295 = vsel %vm960, %v1266, 0
      %v1298 = vsel %vm960, %v1267, 0
      %v1301 = vsel %vm985, %v1275, 0
      %1303 = vmatprep.subr.bf16.mxu0 0
      %1304 = vmatpush1.bf16.msra.mxu0 %v1301
      %1305 = vmatprep.subr.bf16.mxu0 0
      %1306 = vmatpush1.bf16.msra.mxu0 0
      %1307 = vmatprep.subr.bf16.mxu0 0
      %1308 = vmatpush1.bf16.msra.mxu0 0
      %1309 = vmatprep.subr.bf16.mxu0 0
      %1310 = vmatpush1.bf16.msra.mxu0 0
      %1311 = vmatprep.subr.bf16.mxu0 0
      %1312 = vmatpush1.bf16.msra.mxu0 0
      %1313 = vmatprep.subr.bf16.mxu0 0
      %1314 = vmatpush1.bf16.msra.mxu0 0
      %1315 = vmatprep.subr.bf16.mxu0 0
      %1316 = vmatpush1.bf16.msra.mxu0 0
      %1317 = vmatprep.subr.bf16.mxu0 0
      %1318 = vmatpush1.bf16.msra.mxu0 0
      %1319 = vmatprep.subr.bf16.mxu0 0
      %1320 = vmatpush1.bf16.msra.mxu0 0
      %1321 = vmatprep.subr.bf16.mxu0 0
      %1322 = vmatpush1.bf16.msra.mxu0 0
      %1323 = vmatprep.subr.bf16.mxu0 0
      %1324 = vmatpush1.bf16.msra.mxu0 0
      %1325 = vmatprep.subr.bf16.mxu0 0
      %1326 = vmatpush1.bf16.msra.mxu0 0
      %1327 = vmatprep.subr.bf16.mxu0 0
      %1328 = vmatpush1.bf16.msra.mxu0 0
      %1329 = vmatprep.subr.bf16.mxu0 0
      %1330 = vmatpush1.bf16.msra.mxu0 0
      %1331 = vmatprep.subr.bf16.mxu0 0
      %1332 = vmatpush1.bf16.msra.mxu0 0
      %1333 = vmatprep.subr.bf16.mxu0 0
      %1334 = vmatpush1.bf16.msra.mxu0 0
      %1335 = vmatprep.mubr.bf16.mxu0 0
      %1336 = vmatmul.mubr.bf16.gmra.mrb[0].mxu0 %v1277
      %v1337 = vpop.f32.mrb[0].mxu0
      %v1338 = vadd.f32 0.0, %v1337
      %v1339 = vpop.f32.mrb[0].mxu0
      %v1340 = vpop.f32.mrb[0].mxu0
      %v1341 = vadd.f32 0.0, %v1340
      %v1342 = vpop.f32.mrb[0].mxu0
      %1343 = vmatprep.mubr.bf16.mxu0 0
      %1344 = vmatmul.mubr.bf16.gmra.mrb[0].mxu0 %v1280
      %v1345 = vpop.f32.mrb[0].mxu0
      %v1346 = vadd.f32 0.0, %v1345
      %v1347 = vpop.f32.mrb[0].mxu0
      %v1348 = vpop.f32.mrb[0].mxu0
      %v1349 = vadd.f32 0.0, %v1348
      %v1350 = vpop.f32.mrb[0].mxu0
      %1351 = vmatprep.mubr.bf16.mxu0 0
      %1352 = vmatmul.mubr.bf16.gmra.mrb[0].mxu0 %v1283
      %v1353 = vpop.f32.mrb[0].mxu0
      %v1354 = vadd.f32 0.0, %v1353
      %v1355 = vpop.f32.mrb[0].mxu0
      %v1356 = vpop.f32.mrb[0].mxu0
      %v1357 = vadd.f32 0.0, %v1356
      %v1358 = vpop.f32.mrb[0].mxu0
      %1359 = vmatprep.mubr.bf16.mxu0 0
      %1360 = vmatmul.mubr.bf16.gmra.mrb[0].mxu0 %v1286
      %v1361 = vpop.f32.mrb[0].mxu0
      %v1362 = vadd.f32 0.0, %v1361
      %v1363 = vpop.f32.mrb[0].mxu0
      %v1364 = vpop.f32.mrb[0].mxu0
      %v1365 = vadd.f32 0.0, %v1364
      %v1366 = vpop.f32.mrb[0].mxu0
      %1367 = vmatprep.mubr.bf16.mxu0 0
      %1368 = vmatmul.mubr.bf16.gmra.mrb[0].mxu0 %v1289
      %v1369 = vpop.f32.mrb[0].mxu0
      %v1370 = vadd.f32 0.0, %v1369
      %v1371 = vpop.f32.mrb[0].mxu0
      %v1372 = vpop.f32.mrb[0].mxu0
      %v1373 = vadd.f32 0.0, %v1372
      %v1374 = vpop.f32.mrb[0].mxu0
      %1375 = vmatprep.mubr.bf16.mxu0 0
      %1376 = vmatmul.mubr.bf16.gmra.mrb[0].mxu0 %v1292
      %v1377 = vpop.f32.mrb[0].mxu0
      %v1378 = vadd.f32 0.0, %v1377
      %v1379 = vpop.f32.mrb[0].mxu0
      %v1380 = vpop.f32.mrb[0].mxu0
      %v1381 = vadd.f32 0.0, %v1380
      %v1382 = vpop.f32.mrb[0].mxu0
      %1383 = vmatprep.mubr.bf16.mxu0 0
      %1384 = vmatmul.mubr.bf16.gmra.mrb[0].mxu0 %v1295
      %v1385 = vpop.f32.mrb[0].mxu0
      %v1386 = vadd.f32 0.0, %v1385
      %v1387 = vpop.f32.mrb[0].mxu0
      %v1388 = vpop.f32.mrb[0].mxu0
      %v1389 = vadd.f32 0.0, %v1388
      %v1390 = vpop.f32.mrb[0].mxu0
      %1391 = vmatprep.mubr.bf16.mxu0 0
      %1392 = vmatmul.mubr.bf16.gmra.mrb[0].mxu0 %v1298
      %v1393 = vpop.f32.mrb[0].mxu0
      %v1394 = vadd.f32 0.0, %v1393
      %v1395 = vpop.f32.mrb[0].mxu0
      %v1396 = vpop.f32.mrb[0].mxu0
      %v1397 = vadd.f32 0.0, %v1396
      %v1398 = vpop.f32.mrb[0].mxu0
      %1399 = vdwg.mxu0
      %v1400 = vadd.f32 %v1243, %v1338
      %v1401 = vadd.f32 %v1244, %v1341
      %v1402 = vadd.f32 %v1245, %v1346
      %v1403 = vadd.f32 %v1246, %v1349
      %v1404 = vadd.f32 %v1247, %v1354
      %v1405 = vadd.f32 %v1248, %v1357
      %v1406 = vadd.f32 %v1249, %v1362
      %v1407 = vadd.f32 %v1250, %v1365
      %v1408 = vadd.f32 %v1251, %v1370
      %v1409 = vadd.f32 %v1252, %v1373
      %v1410 = vadd.f32 %v1253, %v1378
      %v1411 = vadd.f32 %v1254, %v1381
      %v1412 = vadd.f32 %v1255, %v1386
      %v1413 = vadd.f32 %v1256, %v1389
      %v1414 = vadd.f32 %v1257, %v1394
      %v1415 = vadd.f32 %v1258, %v1397
      %vm1416 = vcmp.gt.f32.partialorder %v1400, 0.0
      %vm1417 = vcmp.gt.f32.partialorder %v1401, 0.0
      %vm1418 = vcmp.gt.f32.partialorder %v1402, 0.0
      %vm1419 = vcmp.gt.f32.partialorder %v1403, 0.0
      %vm1420 = vcmp.gt.f32.partialorder %v1404, 0.0
      %vm1421 = vcmp.gt.f32.partialorder %v1405, 0.0
      %vm1422 = vcmp.gt.f32.partialorder %v1406, 0.0
      %vm1423 = vcmp.gt.f32.partialorder %v1407, 0.0
      %vm1424 = vcmp.gt.f32.partialorder %v1408, 0.0
      %vm1425 = vcmp.gt.f32.partialorder %v1409, 0.0
      %vm1426 = vcmp.gt.f32.partialorder %v1410, 0.0
      %vm1427 = vcmp.gt.f32.partialorder %v1411, 0.0
      %vm1428 = vcmp.gt.f32.partialorder %v1412, 0.0
      %vm1429 = vcmp.gt.f32.partialorder %v1413, 0.0
      %vm1430 = vcmp.gt.f32.partialorder %v1414, 0.0
      %vm1431 = vcmp.gt.f32.partialorder %v1415, 0.0
      %v1432 = vmul.f32 %v1400, 0.01
      %v1433 = vmul.f32 %v1401, 0.01
      %v1434 = vmul.f32 %v1402, 0.01
      %v1435 = vmul.f32 %v1403, 0.01
      %v1436 = vmul.f32 %v1404, 0.01
      %v1437 = vmul.f32 %v1405, 0.01
      %v1438 = vmul.f32 %v1406, 0.01
      %v1439 = vmul.f32 %v1407, 0.01
      %v1440 = vmul.f32 %v1408, 0.01
      %v1441 = vmul.f32 %v1409, 0.01
      %v1442 = vmul.f32 %v1410, 0.01
      %v1443 = vmul.f32 %v1411, 0.01
      %v1444 = vmul.f32 %v1412, 0.01
      %v1445 = vmul.f32 %v1413, 0.01
      %v1446 = vmul.f32 %v1414, 0.01
      %v1447 = vmul.f32 %v1415, 0.01
      %v1448 = vsel %vm1416, %v1400, %v1432
      %v1449 = vsel %vm1417, %v1401, %v1433
      %v1450 = vsel %vm1418, %v1402, %v1434
      %v1451 = vsel %vm1419, %v1403, %v1435
      %v1452 = vsel %vm1420, %v1404, %v1436
      %v1453 = vsel %vm1421, %v1405, %v1437
      %v1454 = vsel %vm1422, %v1406, %v1438
      %v1455 = vsel %vm1423, %v1407, %v1439
      %v1456 = vsel %vm1424, %v1408, %v1440
      %v1457 = vsel %vm1425, %v1409, %v1441
      %v1458 = vsel %vm1426, %v1410, %v1442
      %v1459 = vsel %vm1427, %v1411, %v1443
      %v1460 = vsel %vm1428, %v1412, %v1444
      %v1461 = vsel %vm1429, %v1413, %v1445
      %v1462 = vsel %vm1430, %v1414, %v1446
      %v1463 = vsel %vm1431, %v1415, %v1447
      %v1464 = vadd.f32 %v1448, %v336
      %v1465 = vadd.f32 %v1449, %v337
      %v1466 = vadd.f32 %v1450, %v338
      %v1467 = vadd.f32 %v1451, %v339
      %v1468 = vadd.f32 %v1452, %v340
      %v1469 = vadd.f32 %v1453, %v341
      %v1470 = vadd.f32 %v1454, %v342
      %v1471 = vadd.f32 %v1455, %v343
      %v1472 = vadd.f32 %v1456, %v344
      %v1473 = vadd.f32 %v1457, %v345
      %v1474 = vadd.f32 %v1458, %v346
      %v1475 = vadd.f32 %v1459, %v347
      %v1476 = vadd.f32 %v1460, %v348
      %v1477 = vadd.f32 %v1461, %v349
      %v1478 = vadd.f32 %v1462, %v350
      %v1479 = vadd.f32 %v1463, %v351
      %1480 = vst.msk [vmem:[%s333] sm:$0xff] %vm375, %v1464
      %1481 = vst.msk [vmem:[%s333 + $0x8] sm:$0xff] %vm375, %v1465
      %1482 = vst.msk [vmem:[%s333 + $0x10] sm:$0xff] %vm375, %v1466
      %1483 = vst.msk [vmem:[%s333 + $0x18] sm:$0xff] %vm375, %v1467
      %1484 = vst.msk [vmem:[%s333 + $0x20] sm:$0xff] %vm375, %v1468
      %1485 = vst.msk [vmem:[%s333 + $0x28] sm:$0xff] %vm375, %v1469
      %1486 = vst.msk [vmem:[%s333 + $0x30] sm:$0xff] %vm375, %v1470
      %1487 = vst.msk [vmem:[%s333 + $0x38] sm:$0xff] %vm375, %v1471
      %1488 = vst.msk [vmem:[%s333 + $0x40] sm:$0xff] %vm375, %v1472
      %1489 = vst.msk [vmem:[%s333 + $0x48] sm:$0xff] %vm375, %v1473
      %1490 = vst.msk [vmem:[%s333 + $0x50] sm:$0xff] %vm375, %v1474
      %1491 = vst.msk [vmem:[%s333 + $0x58] sm:$0xff] %vm375, %v1475
      %1492 = vst.msk [vmem:[%s333 + $0x60] sm:$0xff] %vm375, %v1476
      %1493 = vst.msk [vmem:[%s333 + $0x68] sm:$0xff] %vm375, %v1477
      %1494 = vst.msk [vmem:[%s333 + $0x70] sm:$0xff] %vm375, %v1478
      %1495 = vst.msk [vmem:[%s333 + $0x78] sm:$0xff] %vm375, %v1479
      %s1496 = smul.u32 8, %s22
      %p1497 = scmp.lt.s32.totalorder %s21, 1
      %s1498 = scalar_select %p1497, %s21, 1
      %p1499 = scmp.lt.s32.totalorder %s1496, 15
      %s1500 = scalar_select %p1499, %s1496, 15
      %s1501 = smul.addr %s1500, 2
      %s1502 = smul.addr %s1498, 32
      %s1503 = sadd.s32 %s1501, %s1502
      %s1504 = smul.addr %s1503, 8
      %s1505 = scalar_lea.vmem %s6, %s1504
      // Predicated region
      $region45: #{res_unit_pallas.1} parent=43 // pred_check
        %p1506 = pneg %p189
      $region46: #{res_unit_pallas.1} parent=43 // pred_check_branch
        %1508 = sbr.rel (%p1506) target = $region48
      $region47: #{res_unit_pallas.1} parent=43 // pred_region
        %s1509 = smul.u32 8, %s22
      $region48: #{res_unit_pallas.1} parent=43 // pred_fallthru
        _
    $region44: #{res_unit_pallas.1} parent=5 // pred_fallthru
      _
    %p1510 = scmp.le.s32.totalorder 2, %s12
    // Predicated region
    $region49: #{res_unit_pallas.1} parent=5 // pred_check
      %p1511 = pneg %p1510
    $region50: #{res_unit_pallas.1} parent=5 // pred_check_branch
      %1513 = sbr.rel (%p1511) target = $region52
    $region51: #{res_unit_pallas.1} parent=5 // pred_region
      %s1514 = ssub.s32 %s12, 2
      // Predicated region
      $region53: #{res_unit_pallas.1} parent=51 // pred_check
        %p1515 = pneg %p195
      $region54: #{res_unit_pallas.1} parent=51 // pred_check_branch
        %1517 = sbr.rel (%p1515) target = $region56
      $region55: #{res_unit_pallas.1} parent=51 // pred_region
        %s1518 = smul.u32 8, %s24
        %p1519 = scmp.lt.s32.totalorder %s23, 1
        %s1520 = scalar_select %p1519, %s23, 1
        %p1521 = scmp.lt.s32.totalorder %s1518, 15
        %s1522 = scalar_select %p1521, %s1518, 15
        %s1523 = smul.addr %s1522, 2
        %s1524 = smul.addr %s1520, 32
        %s1525 = sadd.s32 %s1523, %s1524
        %s1526 = smul.addr %s1525, 8
        %s1527 = scalar_lea.vmem %s6, %s1526
      $region56: #{res_unit_pallas.1} parent=51 // pred_fallthru
        _
    $region52: #{res_unit_pallas.1} parent=5 // pred_fallthru
      _
  $region6: #{res_unit_pallas.1} parent=0 // loop_footer
    %s16 = sadd.s32 1, %s12
  $region7: #{res_unit_pallas.1} parent=0 // loop_footer_branch
    %11 = sbr.rel target = $region3
  $region8: #{res_unit_pallas.1} parent=0 // loop_exit
    _

</llo_original>
